<compile_context>
chip_gen: v5e
topology: v5e:2x2
jax: 0.10.0
libtpu: 0.0.40
codegen_flags: <defaults>
</compile_context>

<pallas_src>
import functools

import numpy as np
import jax
import jax.numpy as jnp
from jax.experimental import pallas as pl


# ----------------------------------------------------------------------------
# The single fused kernel.
# Activation layout: rows = (b, spatial_row), lanes = (spatial_col, channel).
# ----------------------------------------------------------------------------
def _lenet5_kernel(x_ref, m1_ref, b1_ref, pc1_ref, pr1_ref,
                   m2_ref, b2_ref, pc2_ref, pr2_ref,
                   m3_ref, b3_ref, wf1_ref, bf1_ref, wf2_ref, bf2_ref,
                   l1_ref, probs_ref, *, batch, n_classes):
    f32 = jnp.float32
    B = batch

    def dot(a, b):
        return jnp.dot(a, b, preferred_element_type=f32)

    # ---- conv1 (1->6, 5x5, valid) + tanh ------------------------------------
    # x: rows = (b, h) with h < 32 (+4 zero rows), 32 lanes = w.
    x = x_ref[...]                                          # (B*32+4, 32)
    acc = dot(x[0:B * 32, :], m1_ref[0])
    for di in range(1, 5):
        acc = acc + dot(x[di:di + B * 32, :], m1_ref[di])
    y1 = jnp.tanh(acc + b1_ref[...])                        # (B*32, 168) lanes=(j<28, c<6)

    # ---- AvgPool2d(2): lane-pool then row-pool, both tiny matmuls -----------
    p1 = dot(pr1_ref[...], dot(y1, pc1_ref[...]))           # (B*14+4, 84) lanes=(j<14, c<6)

    # ---- conv2 (6->16, 5x5, valid) + tanh ------------------------------------
    acc = dot(p1[0:B * 14, :], m2_ref[0])
    for di in range(1, 5):
        acc = acc + dot(p1[di:di + B * 14, :], m2_ref[di])
    y2 = jnp.tanh(acc + b2_ref[...])                        # (B*14, 160) lanes=(j<10, c<16)

    # ---- AvgPool2d(2) --------------------------------------------------------
    p2 = dot(pr2_ref[...], dot(y2, pc2_ref[...]))           # (B*5+4, 80) lanes=(j<5, c<16)

    # ---- conv3 (16->120, 5x5 -> 1x1 spatial) + tanh --------------------------
    acc = dot(p2[0:B * 5, :], m3_ref[0])
    for di in range(1, 5):
        acc = acc + dot(p2[di:di + B * 5, :], m3_ref[di])   # (B*5, 120); row b*5 is valid
    feat = jnp.concatenate([acc[b * 5:b * 5 + 1, :] for b in range(B)], axis=0)
    feat = jnp.tanh(feat + b3_ref[...])                     # (B, 120) == torch.flatten(x, 1)

    # ---- classifier1: Linear(120, 84) + tanh (lane-padded to 128) ------------
    l1 = jnp.tanh(dot(feat, wf1_ref[...]) + bf1_ref[...])   # (B, 128), lanes >= 84 are 0
    l1_ref[...] = l1

    # ---- classifier2: Linear(84, n_classes) + fused masked softmax -----------
    logits = dot(l1, wf2_ref[...]) + bf2_ref[...]           # (B, 128), lanes >= n are 0
    lane = jax.lax.broadcasted_iota(jnp.int32, logits.shape, 1)
    logits = jnp.where(lane < n_classes, logits, -1e30)     # drop padded lanes
    mx = jnp.max(logits, axis=1, keepdims=True)
    e = jnp.exp(logits - mx)
    s = jnp.sum(e, axis=1, keepdims=True)
    probs_ref[...] = e * pl.reciprocal(s, approx=True)


def lenet5_forward(x, prepped, *, n_classes):
    """x: (B, 1, 32, 32) NCHW (PyTorch layout). Returns (l1 (B,84), probs (B,n))."""
    B = x.shape[0]
    assert x.shape[1:] == (1, 32, 32), "LeNet-5 expects (B, 1, 32, 32) input"
    # Only per-call glue: flatten to rows=(b,h), lanes=w, add 4 zero rows for
    # the conv1 row-shift window (8.5 KiB total).
    xr = jnp.pad(x.reshape(B * 32, 32).astype(jnp.float32), ((0, 4), (0, 0)))
    kern = functools.partial(_lenet5_kernel, batch=B, n_classes=n_classes)
    l1_pad, probs_pad = pl.pallas_call(
        kern,
        out_shape=(jax.ShapeDtypeStruct((B, 128), jnp.float32),
                   jax.ShapeDtypeStruct((B, 128), jnp.float32)),
    )(xr, prepped["m1"], prepped["b1"], prepped["pc1"], prepped["pr1"],
      prepped["m2"], prepped["b2"], prepped["pc2"], prepped["pr2"],
      prepped["m3"], prepped["b3"], prepped["wf1"], prepped["bf1"],
      prepped["wf2"], prepped["bf2"])
    return l1_pad[:, :84], probs_pad[:, :n_classes]


# ----------------------------------------------------------------------------
# One-time parameter prep (host-side numpy): banded conv matrices, pooling
# selection matrices, 128-lane-padded FC weights.
# ----------------------------------------------------------------------------
def _band_conv_mats(w, j_in, j_out):
    """w: (O, C, k, k) PyTorch layout -> (k, j_in*C, j_out*O).
    For kernel row di:  out[(b,i), j*O+o] += in[(b,i+di), (j+dj)*C+c] * w[o,c,di,dj]."""
    O, C, k, _ = w.shape
    m = np.zeros((k, j_in * C, j_out * O), dtype=np.float32)
    for di in range(k):
        for dj in range(k):
            blk = np.transpose(w[:, :, di, dj])            # (C, O)
            for j in range(j_out):
                m[di, (j + dj) * C:(j + dj + 1) * C, j * O:(j + 1) * O] = blk
    return m


def _pool_lane_mat(j_in, j_out, c):
    """Averages lane pairs (2j, 2j+1) per channel: (j_in*c, j_out*c), entries 0.5."""
    m = np.zeros((j_in * c, j_out * c), dtype=np.float32)
    for j in range(j_out):
        for a in range(2):
            for ch in range(c):
                m[(2 * j + a) * c + ch, j * c + ch] = 0.5
    return m


def _pool_row_mat(batch, h_in, h_out, pad_rows):
    """Averages row pairs per batch and appends pad_rows zero rows (for the next
    conv's row-shift window): (batch*h_out + pad_rows, batch*h_in), entries 0.5."""
    m = np.zeros((batch * h_out + pad_rows, batch * h_in), dtype=np.float32)
    for b in range(batch):
        for i in range(h_out):
            for a in range(2):
                m[b * h_out + i, b * h_in + 2 * i + a] = 0.5
    return m


def prepare_params(params, *, n_classes, batch):
    p = {k: np.asarray(v, dtype=np.float32) for k, v in params.items()}
    wf1p = np.zeros((120, 128), np.float32); wf1p[:, :84] = p["wf1"].T
    bf1p = np.zeros((1, 128), np.float32);   bf1p[0, :84] = p["bf1"]
    wf2p = np.zeros((128, 128), np.float32); wf2p[:84, :n_classes] = p["wf2"].T
    bf2p = np.zeros((1, 128), np.float32);   bf2p[0, :n_classes] = p["bf2"]
    prepped = {
        "m1": _band_conv_mats(p["w1"], 32, 28),        # (5, 32, 168)
        "b1": np.tile(p["b1"], 28)[None, :],           # (1, 168)  lanes=(j, o)
        "pc1": _pool_lane_mat(28, 14, 6),              # (168, 84)
        "pr1": _pool_row_mat(batch, 32, 14, 4),        # (B*14+4, B*32)
        "m2": _band_conv_mats(p["w2"], 14, 10),        # (5, 84, 160)
        "b2": np.tile(p["b2"], 10)[None, :],           # (1, 160)
        "pc2": _pool_lane_mat(10, 5, 16),              # (160, 80)
        "pr2": _pool_row_mat(batch, 14, 5, 4),         # (B*5+4, B*14)
        "m3": _band_conv_mats(p["w3"], 5, 1),          # (5, 80, 120)
        "b3": p["b3"][None, :],                        # (1, 120)
        "wf1": wf1p, "bf1": bf1p, "wf2": wf2p, "bf2": bf2p,
    }
    return {k: jnp.asarray(v) for k, v in prepped.items()}


# ----------------------------------------------------------------------------
# Torch-layout parameter init + plain-JAX reference (for correctness check).
# ----------------------------------------------------------------------------
def init_params(key, n_classes):
    ks = jax.random.split(key, 10)
    s = 0.1
    return {
        "w1": jax.random.normal(ks[0], (6, 1, 5, 5), jnp.float32) * s,
        "b1": jax.random.normal(ks[1], (6,), jnp.float32) * s,
        "w2": jax.random.normal(ks[2], (16, 6, 5, 5), jnp.float32) * s,
        "b2": jax.random.normal(ks[3], (16,), jnp.float32) * s,
        "w3": jax.random.normal(ks[4], (120, 16, 5, 5), jnp.float32) * s,
        "b3": jax.random.normal(ks[5], (120,), jnp.float32) * s,
        "wf1": jax.random.normal(ks[6], (84, 120), jnp.float32) * s,
        "bf1": jax.random.normal(ks[7], (84,), jnp.float32) * s,
        "wf2": jax.random.normal(ks[8], (n_classes, 84), jnp.float32) * s,
        "bf2": jax.random.normal(ks[9], (n_classes,), jnp.float32) * s,
    }


def lenet5_reference(x, params):
    def conv_tanh(y, w, b):
        y = jax.lax.conv_general_dilated(
            y, w, window_strides=(1, 1), padding="VALID",
            dimension_numbers=("NCHW", "OIHW", "NCHW"))
        return jnp.tanh(y + b[None, :, None, None])

    def avgpool2(y):
        B, C, H, W = y.shape
        return y.reshape(B, C, H // 2, 2, W // 2, 2).mean(axis=(3, 5))

    y = avgpool2(conv_tanh(x, params["w1"], params["b1"]))
    y = avgpool2(conv_tanh(y, params["w2"], params["b2"]))
    y = conv_tanh(y, params["w3"], params["b3"])
    feat = y.reshape(x.shape[0], -1)
    l1 = jnp.tanh(feat @ params["wf1"].T + params["bf1"])
    logits = l1 @ params["wf2"].T + params["bf2"]
    return l1, jax.nn.softmax(logits, axis=1)


if __name__ == "__main__":
    n_classes = 10
    batch = 2
    key = jax.random.PRNGKey(0)
    k_x, k_p = jax.random.split(key)
    # LeNet-5 geometry requires a 32x32 single-channel input (conv3 out is 1x1).
    x = jax.random.normal(k_x, (batch, 1, 32, 32), jnp.float32)
    params = init_params(k_p, n_classes)

    prepped = prepare_params(params, n_classes=n_classes, batch=batch)
    fwd = jax.jit(functools.partial(lenet5_forward, n_classes=n_classes))
    l1, probs = fwd(x, prepped)
    jax.block_until_ready((l1, probs))

    assert l1.shape == (batch, 84) and probs.shape == (batch, n_classes)
    assert bool(jnp.all(jnp.isfinite(l1))) and bool(jnp.all(jnp.isfinite(probs)))
    assert bool(jnp.allclose(jnp.sum(probs, axis=1), 1.0, atol=2e-3))

    # Numerical check against the plain-JAX reference of the PyTorch module.
    l1_exp, probs_exp = lenet5_reference(x, params)
    assert bool(jnp.allclose(l1, l1_exp, atol=3e-2)), float(jnp.max(jnp.abs(l1 - l1_exp)))
    assert bool(jnp.allclose(probs, probs_exp, atol=1e-2)), float(jnp.max(jnp.abs(probs - probs_exp)))
    print("KERNEL_OK")
</pallas_src>

<mosaic_0001>
module attributes {stable_mosaic.version = 11 : i64} {
  func.func @_lenet5_kernel(%arg0: memref<68x32xf32, #tpu.memory_space<vmem>>, %arg1: memref<5x32x168xf32, #tpu.memory_space<vmem>>, %arg2: memref<1x168xf32, #tpu.memory_space<vmem>>, %arg3: memref<168x84xf32, #tpu.memory_space<vmem>>, %arg4: memref<32x64xf32, #tpu.memory_space<vmem>>, %arg5: memref<5x84x160xf32, #tpu.memory_space<vmem>>, %arg6: memref<1x160xf32, #tpu.memory_space<vmem>>, %arg7: memref<160x80xf32, #tpu.memory_space<vmem>>, %arg8: memref<14x28xf32, #tpu.memory_space<vmem>>, %arg9: memref<5x80x120xf32, #tpu.memory_space<vmem>>, %arg10: memref<1x120xf32, #tpu.memory_space<vmem>>, %arg11: memref<120x128xf32, #tpu.memory_space<vmem>>, %arg12: memref<1x128xf32, #tpu.memory_space<vmem>>, %arg13: memref<128x128xf32, #tpu.memory_space<vmem>>, %arg14: memref<1x128xf32, #tpu.memory_space<vmem>>, %arg15: memref<2x128xf32, #tpu.memory_space<vmem>>, %arg16: memref<2x128xf32, #tpu.memory_space<vmem>>) attributes {dimension_semantics = [], scalar_prefetch = 0 : i64, scratch_operands = 0 : i64, tpu.core_type = #tpu.core_type<tc>} {
    %c0 = arith.constant 0 : index
    %c0_0 = arith.constant 0 : index
    %0 = vector.load %arg0[%c0, %c0_0] : memref<68x32xf32, #tpu.memory_space<vmem>>, vector<68x32xf32>
    %1 = vector.extract_strided_slice %0 {offsets = [0, 0], sizes = [64, 32], strides = [1, 1]} : vector<68x32xf32> to vector<64x32xf32>
    %c0_1 = arith.constant 0 : index
    %c0_2 = arith.constant 0 : index
    %c0_3 = arith.constant 0 : index
    %2 = vector.load %arg1[%c0_1, %c0_2, %c0_3] : memref<5x32x168xf32, #tpu.memory_space<vmem>>, vector<1x32x168xf32>
    %3 = vector.shape_cast %2 : vector<1x32x168xf32> to vector<32x168xf32>
    %cst = arith.constant dense<0.000000e+00> : vector<64x168xf32>
    %4 = tpu.matmul %1, %3, %cst {dimension_numbers = #tpu.dot_dimension_numbers<[1], [0], [0], [1], [0, 0, 1, 1], [], []>} : vector<64x32xf32>, vector<32x168xf32>, vector<64x168xf32> -> vector<64x168xf32>
    %5 = vector.extract_strided_slice %0 {offsets = [1, 0], sizes = [64, 32], strides = [1, 1]} : vector<68x32xf32> to vector<64x32xf32>
    %c1 = arith.constant 1 : index
    %c0_4 = arith.constant 0 : index
    %c0_5 = arith.constant 0 : index
    %6 = vector.load %arg1[%c1, %c0_4, %c0_5] : memref<5x32x168xf32, #tpu.memory_space<vmem>>, vector<1x32x168xf32>
    %7 = vector.shape_cast %6 : vector<1x32x168xf32> to vector<32x168xf32>
    %cst_6 = arith.constant dense<0.000000e+00> : vector<64x168xf32>
    %8 = tpu.matmul %5, %7, %cst_6 {dimension_numbers = #tpu.dot_dimension_numbers<[1], [0], [0], [1], [0, 0, 1, 1], [], []>} : vector<64x32xf32>, vector<32x168xf32>, vector<64x168xf32> -> vector<64x168xf32>
    %9 = arith.addf %4, %8 : vector<64x168xf32>
    %10 = vector.extract_strided_slice %0 {offsets = [2, 0], sizes = [64, 32], strides = [1, 1]} : vector<68x32xf32> to vector<64x32xf32>
    %c2 = arith.constant 2 : index
    %c0_7 = arith.constant 0 : index
    %c0_8 = arith.constant 0 : index
    %11 = vector.load %arg1[%c2, %c0_7, %c0_8] : memref<5x32x168xf32, #tpu.memory_space<vmem>>, vector<1x32x168xf32>
    %12 = vector.shape_cast %11 : vector<1x32x168xf32> to vector<32x168xf32>
    %cst_9 = arith.constant dense<0.000000e+00> : vector<64x168xf32>
    %13 = tpu.matmul %10, %12, %cst_9 {dimension_numbers = #tpu.dot_dimension_numbers<[1], [0], [0], [1], [0, 0, 1, 1], [], []>} : vector<64x32xf32>, vector<32x168xf32>, vector<64x168xf32> -> vector<64x168xf32>
    %14 = arith.addf %9, %13 : vector<64x168xf32>
    %15 = vector.extract_strided_slice %0 {offsets = [3, 0], sizes = [64, 32], strides = [1, 1]} : vector<68x32xf32> to vector<64x32xf32>
    %c3 = arith.constant 3 : index
    %c0_10 = arith.constant 0 : index
    %c0_11 = arith.constant 0 : index
    %16 = vector.load %arg1[%c3, %c0_10, %c0_11] : memref<5x32x168xf32, #tpu.memory_space<vmem>>, vector<1x32x168xf32>
    %17 = vector.shape_cast %16 : vector<1x32x168xf32> to vector<32x168xf32>
    %cst_12 = arith.constant dense<0.000000e+00> : vector<64x168xf32>
    %18 = tpu.matmul %15, %17, %cst_12 {dimension_numbers = #tpu.dot_dimension_numbers<[1], [0], [0], [1], [0, 0, 1, 1], [], []>} : vector<64x32xf32>, vector<32x168xf32>, vector<64x168xf32> -> vector<64x168xf32>
    %19 = arith.addf %14, %18 : vector<64x168xf32>
    %20 = vector.extract_strided_slice %0 {offsets = [4, 0], sizes = [64, 32], strides = [1, 1]} : vector<68x32xf32> to vector<64x32xf32>
    %c4 = arith.constant 4 : index
    %c0_13 = arith.constant 0 : index
    %c0_14 = arith.constant 0 : index
    %21 = vector.load %arg1[%c4, %c0_13, %c0_14] : memref<5x32x168xf32, #tpu.memory_space<vmem>>, vector<1x32x168xf32>
    %22 = vector.shape_cast %21 : vector<1x32x168xf32> to vector<32x168xf32>
    %cst_15 = arith.constant dense<0.000000e+00> : vector<64x168xf32>
    %23 = tpu.matmul %20, %22, %cst_15 {dimension_numbers = #tpu.dot_dimension_numbers<[1], [0], [0], [1], [0, 0, 1, 1], [], []>} : vector<64x32xf32>, vector<32x168xf32>, vector<64x168xf32> -> vector<64x168xf32>
    %24 = arith.addf %19, %23 : vector<64x168xf32>
    %c0_16 = arith.constant 0 : index
    %c0_17 = arith.constant 0 : index
    %25 = vector.load %arg2[%c0_16, %c0_17] : memref<1x168xf32, #tpu.memory_space<vmem>>, vector<1x168xf32>
    %26 = vector.broadcast %25 : vector<1x168xf32> to vector<64x168xf32>
    %27 = arith.addf %24, %26 : vector<64x168xf32>
    %28 = math.tanh %27 : vector<64x168xf32>
    %c0_18 = arith.constant 0 : index
    %c0_19 = arith.constant 0 : index
    %29 = vector.load %arg4[%c0_18, %c0_19] : memref<32x64xf32, #tpu.memory_space<vmem>>, vector<32x64xf32>
    %c0_20 = arith.constant 0 : index
    %c0_21 = arith.constant 0 : index
    %30 = vector.load %arg3[%c0_20, %c0_21] : memref<168x84xf32, #tpu.memory_space<vmem>>, vector<168x84xf32>
    %cst_22 = arith.constant dense<0.000000e+00> : vector<64x84xf32>
    %31 = tpu.matmul %28, %30, %cst_22 {dimension_numbers = #tpu.dot_dimension_numbers<[1], [0], [0], [1], [0, 0, 1, 1], [], []>} : vector<64x168xf32>, vector<168x84xf32>, vector<64x84xf32> -> vector<64x84xf32>
    %cst_23 = arith.constant dense<0.000000e+00> : vector<32x84xf32>
    %32 = tpu.matmul %29, %31, %cst_23 {dimension_numbers = #tpu.dot_dimension_numbers<[1], [0], [0], [1], [0, 0, 1, 1], [], []>} : vector<32x64xf32>, vector<64x84xf32>, vector<32x84xf32> -> vector<32x84xf32>
    %33 = vector.extract_strided_slice %32 {offsets = [0, 0], sizes = [28, 84], strides = [1, 1]} : vector<32x84xf32> to vector<28x84xf32>
    %c0_24 = arith.constant 0 : index
    %c0_25 = arith.constant 0 : index
    %c0_26 = arith.constant 0 : index
    %34 = vector.load %arg5[%c0_24, %c0_25, %c0_26] : memref<5x84x160xf32, #tpu.memory_space<vmem>>, vector<1x84x160xf32>
    %35 = vector.shape_cast %34 : vector<1x84x160xf32> to vector<84x160xf32>
    %cst_27 = arith.constant dense<0.000000e+00> : vector<28x160xf32>
    %36 = tpu.matmul %33, %35, %cst_27 {dimension_numbers = #tpu.dot_dimension_numbers<[1], [0], [0], [1], [0, 0, 1, 1], [], []>} : vector<28x84xf32>, vector<84x160xf32>, vector<28x160xf32> -> vector<28x160xf32>
    %37 = vector.extract_strided_slice %32 {offsets = [1, 0], sizes = [28, 84], strides = [1, 1]} : vector<32x84xf32> to vector<28x84xf32>
    %c1_28 = arith.constant 1 : index
    %c0_29 = arith.constant 0 : index
    %c0_30 = arith.constant 0 : index
    %38 = vector.load %arg5[%c1_28, %c0_29, %c0_30] : memref<5x84x160xf32, #tpu.memory_space<vmem>>, vector<1x84x160xf32>
    %39 = vector.shape_cast %38 : vector<1x84x160xf32> to vector<84x160xf32>
    %cst_31 = arith.constant dense<0.000000e+00> : vector<28x160xf32>
    %40 = tpu.matmul %37, %39, %cst_31 {dimension_numbers = #tpu.dot_dimension_numbers<[1], [0], [0], [1], [0, 0, 1, 1], [], []>} : vector<28x84xf32>, vector<84x160xf32>, vector<28x160xf32> -> vector<28x160xf32>
    %41 = arith.addf %36, %40 : vector<28x160xf32>
    %42 = vector.extract_strided_slice %32 {offsets = [2, 0], sizes = [28, 84], strides = [1, 1]} : vector<32x84xf32> to vector<28x84xf32>
    %c2_32 = arith.constant 2 : index
    %c0_33 = arith.constant 0 : index
    %c0_34 = arith.constant 0 : index
    %43 = vector.load %arg5[%c2_32, %c0_33, %c0_34] : memref<5x84x160xf32, #tpu.memory_space<vmem>>, vector<1x84x160xf32>
    %44 = vector.shape_cast %43 : vector<1x84x160xf32> to vector<84x160xf32>
    %cst_35 = arith.constant dense<0.000000e+00> : vector<28x160xf32>
    %45 = tpu.matmul %42, %44, %cst_35 {dimension_numbers = #tpu.dot_dimension_numbers<[1], [0], [0], [1], [0, 0, 1, 1], [], []>} : vector<28x84xf32>, vector<84x160xf32>, vector<28x160xf32> -> vector<28x160xf32>
    %46 = arith.addf %41, %45 : vector<28x160xf32>
    %47 = vector.extract_strided_slice %32 {offsets = [3, 0], sizes = [28, 84], strides = [1, 1]} : vector<32x84xf32> to vector<28x84xf32>
    %c3_36 = arith.constant 3 : index
    %c0_37 = arith.constant 0 : index
    %c0_38 = arith.constant 0 : index
    %48 = vector.load %arg5[%c3_36, %c0_37, %c0_38] : memref<5x84x160xf32, #tpu.memory_space<vmem>>, vector<1x84x160xf32>
    %49 = vector.shape_cast %48 : vector<1x84x160xf32> to vector<84x160xf32>
    %cst_39 = arith.constant dense<0.000000e+00> : vector<28x160xf32>
    %50 = tpu.matmul %47, %49, %cst_39 {dimension_numbers = #tpu.dot_dimension_numbers<[1], [0], [0], [1], [0, 0, 1, 1], [], []>} : vector<28x84xf32>, vector<84x160xf32>, vector<28x160xf32> -> vector<28x160xf32>
    %51 = arith.addf %46, %50 : vector<28x160xf32>
    %52 = vector.extract_strided_slice %32 {offsets = [4, 0], sizes = [28, 84], strides = [1, 1]} : vector<32x84xf32> to vector<28x84xf32>
    %c4_40 = arith.constant 4 : index
    %c0_41 = arith.constant 0 : index
    %c0_42 = arith.constant 0 : index
    %53 = vector.load %arg5[%c4_40, %c0_41, %c0_42] : memref<5x84x160xf32, #tpu.memory_space<vmem>>, vector<1x84x160xf32>
    %54 = vector.shape_cast %53 : vector<1x84x160xf32> to vector<84x160xf32>
    %cst_43 = arith.constant dense<0.000000e+00> : vector<28x160xf32>
    %55 = tpu.matmul %52, %54, %cst_43 {dimension_numbers = #tpu.dot_dimension_numbers<[1], [0], [0], [1], [0, 0, 1, 1], [], []>} : vector<28x84xf32>, vector<84x160xf32>, vector<28x160xf32> -> vector<28x160xf32>
    %56 = arith.addf %51, %55 : vector<28x160xf32>
    %c0_44 = arith.constant 0 : index
    %c0_45 = arith.constant 0 : index
    %57 = vector.load %arg6[%c0_44, %c0_45] : memref<1x160xf32, #tpu.memory_space<vmem>>, vector<1x160xf32>
    %58 = vector.broadcast %57 : vector<1x160xf32> to vector<28x160xf32>
    %59 = arith.addf %56, %58 : vector<28x160xf32>
    %60 = math.tanh %59 : vector<28x160xf32>
    %c0_46 = arith.constant 0 : index
    %c0_47 = arith.constant 0 : index
    %61 = vector.load %arg8[%c0_46, %c0_47] : memref<14x28xf32, #tpu.memory_space<vmem>>, vector<14x28xf32>
    %c0_48 = arith.constant 0 : index
    %c0_49 = arith.constant 0 : index
    %62 = vector.load %arg7[%c0_48, %c0_49] : memref<160x80xf32, #tpu.memory_space<vmem>>, vector<160x80xf32>
    %cst_50 = arith.constant dense<0.000000e+00> : vector<28x80xf32>
    %63 = tpu.matmul %60, %62, %cst_50 {dimension_numbers = #tpu.dot_dimension_numbers<[1], [0], [0], [1], [0, 0, 1, 1], [], []>} : vector<28x160xf32>, vector<160x80xf32>, vector<28x80xf32> -> vector<28x80xf32>
    %cst_51 = arith.constant dense<0.000000e+00> : vector<14x80xf32>
    %64 = tpu.matmul %61, %63, %cst_51 {dimension_numbers = #tpu.dot_dimension_numbers<[1], [0], [0], [1], [0, 0, 1, 1], [], []>} : vector<14x28xf32>, vector<28x80xf32>, vector<14x80xf32> -> vector<14x80xf32>
    %65 = vector.extract_strided_slice %64 {offsets = [0, 0], sizes = [10, 80], strides = [1, 1]} : vector<14x80xf32> to vector<10x80xf32>
    %c0_52 = arith.constant 0 : index
    %c0_53 = arith.constant 0 : index
    %c0_54 = arith.constant 0 : index
    %66 = vector.load %arg9[%c0_52, %c0_53, %c0_54] : memref<5x80x120xf32, #tpu.memory_space<vmem>>, vector<1x80x120xf32>
    %67 = vector.shape_cast %66 : vector<1x80x120xf32> to vector<80x120xf32>
    %cst_55 = arith.constant dense<0.000000e+00> : vector<10x120xf32>
    %68 = tpu.matmul %65, %67, %cst_55 {dimension_numbers = #tpu.dot_dimension_numbers<[1], [0], [0], [1], [0, 0, 1, 1], [], []>} : vector<10x80xf32>, vector<80x120xf32>, vector<10x120xf32> -> vector<10x120xf32>
    %69 = vector.extract_strided_slice %64 {offsets = [1, 0], sizes = [10, 80], strides = [1, 1]} : vector<14x80xf32> to vector<10x80xf32>
    %c1_56 = arith.constant 1 : index
    %c0_57 = arith.constant 0 : index
    %c0_58 = arith.constant 0 : index
    %70 = vector.load %arg9[%c1_56, %c0_57, %c0_58] : memref<5x80x120xf32, #tpu.memory_space<vmem>>, vector<1x80x120xf32>
    %71 = vector.shape_cast %70 : vector<1x80x120xf32> to vector<80x120xf32>
    %cst_59 = arith.constant dense<0.000000e+00> : vector<10x120xf32>
    %72 = tpu.matmul %69, %71, %cst_59 {dimension_numbers = #tpu.dot_dimension_numbers<[1], [0], [0], [1], [0, 0, 1, 1], [], []>} : vector<10x80xf32>, vector<80x120xf32>, vector<10x120xf32> -> vector<10x120xf32>
    %73 = arith.addf %68, %72 : vector<10x120xf32>
    %74 = vector.extract_strided_slice %64 {offsets = [2, 0], sizes = [10, 80], strides = [1, 1]} : vector<14x80xf32> to vector<10x80xf32>
    %c2_60 = arith.constant 2 : index
    %c0_61 = arith.constant 0 : index
    %c0_62 = arith.constant 0 : index
    %75 = vector.load %arg9[%c2_60, %c0_61, %c0_62] : memref<5x80x120xf32, #tpu.memory_space<vmem>>, vector<1x80x120xf32>
    %76 = vector.shape_cast %75 : vector<1x80x120xf32> to vector<80x120xf32>
    %cst_63 = arith.constant dense<0.000000e+00> : vector<10x120xf32>
    %77 = tpu.matmul %74, %76, %cst_63 {dimension_numbers = #tpu.dot_dimension_numbers<[1], [0], [0], [1], [0, 0, 1, 1], [], []>} : vector<10x80xf32>, vector<80x120xf32>, vector<10x120xf32> -> vector<10x120xf32>
    %78 = arith.addf %73, %77 : vector<10x120xf32>
    %79 = vector.extract_strided_slice %64 {offsets = [3, 0], sizes = [10, 80], strides = [1, 1]} : vector<14x80xf32> to vector<10x80xf32>
    %c3_64 = arith.constant 3 : index
    %c0_65 = arith.constant 0 : index
    %c0_66 = arith.constant 0 : index
    %80 = vector.load %arg9[%c3_64, %c0_65, %c0_66] : memref<5x80x120xf32, #tpu.memory_space<vmem>>, vector<1x80x120xf32>
    %81 = vector.shape_cast %80 : vector<1x80x120xf32> to vector<80x120xf32>
    %cst_67 = arith.constant dense<0.000000e+00> : vector<10x120xf32>
    %82 = tpu.matmul %79, %81, %cst_67 {dimension_numbers = #tpu.dot_dimension_numbers<[1], [0], [0], [1], [0, 0, 1, 1], [], []>} : vector<10x80xf32>, vector<80x120xf32>, vector<10x120xf32> -> vector<10x120xf32>
    %83 = arith.addf %78, %82 : vector<10x120xf32>
    %84 = vector.extract_strided_slice %64 {offsets = [4, 0], sizes = [10, 80], strides = [1, 1]} : vector<14x80xf32> to vector<10x80xf32>
    %c4_68 = arith.constant 4 : index
    %c0_69 = arith.constant 0 : index
    %c0_70 = arith.constant 0 : index
    %85 = vector.load %arg9[%c4_68, %c0_69, %c0_70] : memref<5x80x120xf32, #tpu.memory_space<vmem>>, vector<1x80x120xf32>
    %86 = vector.shape_cast %85 : vector<1x80x120xf32> to vector<80x120xf32>
    %cst_71 = arith.constant dense<0.000000e+00> : vector<10x120xf32>
    %87 = tpu.matmul %84, %86, %cst_71 {dimension_numbers = #tpu.dot_dimension_numbers<[1], [0], [0], [1], [0, 0, 1, 1], [], []>} : vector<10x80xf32>, vector<80x120xf32>, vector<10x120xf32> -> vector<10x120xf32>
    %88 = arith.addf %83, %87 : vector<10x120xf32>
    %89 = vector.extract_strided_slice %88 {offsets = [0, 0], sizes = [1, 120], strides = [1, 1]} : vector<10x120xf32> to vector<1x120xf32>
    %90 = vector.extract_strided_slice %88 {offsets = [5, 0], sizes = [1, 120], strides = [1, 1]} : vector<10x120xf32> to vector<1x120xf32>
    %91 = tpu.concatenate %89, %90 in 0 : vector<1x120xf32>, vector<1x120xf32> -> vector<2x120xf32>
    %c0_72 = arith.constant 0 : index
    %c0_73 = arith.constant 0 : index
    %92 = vector.load %arg10[%c0_72, %c0_73] : memref<1x120xf32, #tpu.memory_space<vmem>>, vector<1x120xf32>
    %93 = vector.broadcast %92 : vector<1x120xf32> to vector<2x120xf32>
    %94 = arith.addf %91, %93 : vector<2x120xf32>
    %95 = math.tanh %94 : vector<2x120xf32>
    %c0_74 = arith.constant 0 : index
    %c0_75 = arith.constant 0 : index
    %96 = vector.load %arg11[%c0_74, %c0_75] : memref<120x128xf32, #tpu.memory_space<vmem>>, vector<120x128xf32>
    %cst_76 = arith.constant dense<0.000000e+00> : vector<2x128xf32>
    %97 = tpu.matmul %95, %96, %cst_76 {dimension_numbers = #tpu.dot_dimension_numbers<[1], [0], [0], [1], [0, 0, 1, 1], [], []>} : vector<2x120xf32>, vector<120x128xf32>, vector<2x128xf32> -> vector<2x128xf32>
    %c0_77 = arith.constant 0 : index
    %c0_78 = arith.constant 0 : index
    %98 = vector.load %arg12[%c0_77, %c0_78] : memref<1x128xf32, #tpu.memory_space<vmem>>, vector<1x128xf32>
    %99 = vector.broadcast %98 : vector<1x128xf32> to vector<2x128xf32>
    %100 = arith.addf %97, %99 : vector<2x128xf32>
    %101 = math.tanh %100 : vector<2x128xf32>
    %c0_79 = arith.constant 0 : index
    %c0_80 = arith.constant 0 : index
    %102 = vector.load %arg15[%c0_79, %c0_80] : memref<2x128xf32, #tpu.memory_space<vmem>>, vector<2x128xf32>
    tpu.vector_store %arg15[%c0_79, %c0_80], %101 {strides = array<i32>} : memref<2x128xf32, #tpu.memory_space<vmem>>, vector<2x128xf32>,
    %c0_81 = arith.constant 0 : index
    %c0_82 = arith.constant 0 : index
    %103 = vector.load %arg13[%c0_81, %c0_82] : memref<128x128xf32, #tpu.memory_space<vmem>>, vector<128x128xf32>
    %cst_83 = arith.constant dense<0.000000e+00> : vector<2x128xf32>
    %104 = tpu.matmul %101, %103, %cst_83 {dimension_numbers = #tpu.dot_dimension_numbers<[1], [0], [0], [1], [0, 0, 1, 1], [], []>} : vector<2x128xf32>, vector<128x128xf32>, vector<2x128xf32> -> vector<2x128xf32>
    %c0_84 = arith.constant 0 : index
    %c0_85 = arith.constant 0 : index
    %105 = vector.load %arg14[%c0_84, %c0_85] : memref<1x128xf32, #tpu.memory_space<vmem>>, vector<1x128xf32>
    %106 = vector.broadcast %105 : vector<1x128xf32> to vector<2x128xf32>
    %107 = arith.addf %104, %106 : vector<2x128xf32>
    %108 = tpu.iota {dimensions = array<i32: 1>} : vector<2x128xi32>
    %c10_i32 = arith.constant 10 : i32
    %109 = vector.broadcast %c10_i32 : i32 to vector<2x128xi32>
    %110 = arith.cmpi slt, %108, %109 : vector<2x128xi32>
    %cst_86 = arith.constant -1.000000e+30 : f32
    %111 = vector.broadcast %cst_86 : f32 to vector<2x128xf32>
    %112 = arith.select %110, %107, %111 : vector<2x128xi1>, vector<2x128xf32>
    %cst_87 = arith.constant dense<0xFF800000> : vector<2xf32>
    %113 = vector.multi_reduction <maximumf>, %112, %cst_87 [1] : vector<2x128xf32> to vector<2xf32>
    %114 = vector.shape_cast %113 : vector<2xf32> to vector<2x1xf32>
    %115 = vector.broadcast %114 : vector<2x1xf32> to vector<2x128xf32>
    %116 = arith.subf %112, %115 : vector<2x128xf32>
    %117 = math.exp %116 : vector<2x128xf32>
    %cst_88 = arith.constant dense<0.000000e+00> : vector<2xf32>
    %118 = vector.multi_reduction <add>, %117, %cst_88 [1] : vector<2x128xf32> to vector<2xf32>
    %119 = vector.shape_cast %118 : vector<2xf32> to vector<2x1xf32>
    %120 = tpu.reciprocal %119 {approx = true} : vector<2x1xf32> -> vector<2x1xf32>
    %121 = vector.broadcast %120 : vector<2x1xf32> to vector<2x128xf32>
    %122 = arith.mulf %117, %121 : vector<2x128xf32>
    %c0_89 = arith.constant 0 : index
    %c0_90 = arith.constant 0 : index
    %123 = vector.load %arg16[%c0_89, %c0_90] : memref<2x128xf32, #tpu.memory_space<vmem>>, vector<2x128xf32>
    tpu.vector_store %arg16[%c0_89, %c0_90], %122 {strides = array<i32>} : memref<2x128xf32, #tpu.memory_space<vmem>>, vector<2x128xf32>,
    return
  }
}

</mosaic_0001>

<llo_original>
// kernel: lenet5_forward.1
$region0: #{lenet5_forward.1}
  #allocation0 [shape = 'u32[]', space=smem, size = 0x4, offset = 0x4, fixed_abs, tag = 'smem constant byte address 0x4 - core index']
  #allocation1 [shape = 'u32[72,128]{1,0:T(1,128)}', space=vmem, size = 0x9000, scoped, tag = 'internal scratch']
  %s0 = inlined_call_operand.vmem [shape: f32[68,32], index: 0, kind: input, shape index: {}]
  %s1 = inlined_call_operand.vmem [shape: f32[5,32,168], index: 1, kind: input, shape index: {}]
  %s2 = inlined_call_operand.vmem [shape: f32[1,168], index: 2, kind: input, shape index: {}]
  %s3 = inlined_call_operand.vmem [shape: f32[168,84], index: 3, kind: input, shape index: {}]
  %s4 = inlined_call_operand.vmem [shape: f32[32,64], index: 4, kind: input, shape index: {}]
  %s5 = inlined_call_operand.vmem [shape: f32[5,84,160], index: 5, kind: input, shape index: {}]
  %s6 = inlined_call_operand.vmem [shape: f32[1,160], index: 6, kind: input, shape index: {}]
  %s7 = inlined_call_operand.vmem [shape: f32[160,80], index: 7, kind: input, shape index: {}]
  %s8 = inlined_call_operand.vmem [shape: f32[14,28], index: 8, kind: input, shape index: {}]
  %s9 = inlined_call_operand.vmem [shape: f32[5,80,120], index: 9, kind: input, shape index: {}]
  %s10 = inlined_call_operand.vmem [shape: f32[1,120], index: 10, kind: input, shape index: {}]
  %s11 = inlined_call_operand.vmem [shape: f32[120,128], index: 11, kind: input, shape index: {}]
  %s12 = inlined_call_operand.vmem [shape: f32[1,128], index: 12, kind: input, shape index: {}]
  %s13 = inlined_call_operand.vmem [shape: f32[128,128], index: 13, kind: input, shape index: {}]
  %s14 = inlined_call_operand.vmem [shape: f32[1,128], index: 14, kind: input, shape index: {}]
  %s15 = inlined_call_operand.hbm [shape: f32[2,128], index: 15, kind: output, shape index: {0}]
  %s16 = inlined_call_operand.hbm [shape: f32[2,128], index: 16, kind: output, shape index: {1}]
  %17 = xla_tuple %s15, %s16
  %s18 = sld [smem:[#allocation0]]
  $region78: #{lenet5_forward.1} parent=0
    _
  %s20 = ssub.s32 1, %s18
  %s21 = scalar_select 0, %s20, %s18
  $region1: #{lenet5_forward.1} parent=0
    #allocation2 [shape = 'u8[1024]{0}', space=vmem, size = 0x400, scoped, tag = 'output window, operand 0, single buffered']
    #allocation3 [shape = 's32[1]{0}', space=sflag, size = 0x4, scoped, tag = 'scoped memory for lenet5_forward.1']
    #allocation4 [shape = 'u8[1024]{0}', space=vmem, size = 0x400, scoped, tag = 'output window, operand 1, single buffered']
    #allocation5 [shape = 's32[1]{0}', space=sflag, size = 0x4, scoped, tag = 'scoped memory for lenet5_forward.1']
    %22 = vsyncpa [#allocation3], 0
    %23 = vsyncpa [#allocation5], 0
    // Predicated region
    $region2: #{lenet5_forward.1} parent=1 // pred_check
      _
    $region3: #{lenet5_forward.1} parent=1 // pred_check_branch
      %25 = sbr.rel (0) target = $region5
    $region4: #{lenet5_forward.1} parent=1 // pred_region
      _
    $region5: #{lenet5_forward.1} parent=1 // pred_fallthru
      _
    // Predicated region
    $region6: #{lenet5_forward.1} parent=1 // pred_check
      _
    $region7: #{lenet5_forward.1} parent=1 // pred_check_branch
      %27 = sbr.rel (0) target = $region9
    $region8: #{lenet5_forward.1} parent=1 // pred_region
      _
    $region9: #{lenet5_forward.1} parent=1 // pred_fallthru
      _
    // Predicated region
    $region10: #{lenet5_forward.1} parent=1 // pred_check
      _
    $region11: #{lenet5_forward.1} parent=1 // pred_check_branch
      %29 = sbr.rel (0) target = $region13
    $region12: #{lenet5_forward.1} parent=1 // pred_region
      _
    $region13: #{lenet5_forward.1} parent=1 // pred_fallthru
      _
    // Predicated region
    $region14: #{lenet5_forward.1} parent=1 // pred_check
      _
    $region15: #{lenet5_forward.1} parent=1 // pred_check_branch
      %31 = sbr.rel (0) target = $region17
    $region16: #{lenet5_forward.1} parent=1 // pred_region
      _
    $region17: #{lenet5_forward.1} parent=1 // pred_fallthru
      _
    // Predicated region
    $region18: #{lenet5_forward.1} parent=1 // pred_check
      _
    $region19: #{lenet5_forward.1} parent=1 // pred_check_branch
      %33 = sbr.rel (0) target = $region21
    $region20: #{lenet5_forward.1} parent=1 // pred_region
      _
    $region21: #{lenet5_forward.1} parent=1 // pred_fallthru
      _
    // Predicated region
    $region22: #{lenet5_forward.1} parent=1 // pred_check
      _
    $region23: #{lenet5_forward.1} parent=1 // pred_check_branch
      %35 = sbr.rel (0) target = $region25
    $region24: #{lenet5_forward.1} parent=1 // pred_region
      _
    $region25: #{lenet5_forward.1} parent=1 // pred_fallthru
      _
    // Predicated region
    $region26: #{lenet5_forward.1} parent=1 // pred_check
      _
    $region27: #{lenet5_forward.1} parent=1 // pred_check_branch
      %37 = sbr.rel (0) target = $region29
    $region28: #{lenet5_forward.1} parent=1 // pred_region
      _
    $region29: #{lenet5_forward.1} parent=1 // pred_fallthru
      _
    // Predicated region
    $region30: #{lenet5_forward.1} parent=1 // pred_check
      _
    $region31: #{lenet5_forward.1} parent=1 // pred_check_branch
      %39 = sbr.rel (0) target = $region33
    $region32: #{lenet5_forward.1} parent=1 // pred_region
      _
    $region33: #{lenet5_forward.1} parent=1 // pred_fallthru
      _
    // Predicated region
    $region34: #{lenet5_forward.1} parent=1 // pred_check
      _
    $region35: #{lenet5_forward.1} parent=1 // pred_check_branch
      %41 = sbr.rel (0) target = $region37
    $region36: #{lenet5_forward.1} parent=1 // pred_region
      _
    $region37: #{lenet5_forward.1} parent=1 // pred_fallthru
      _
    // Predicated region
    $region38: #{lenet5_forward.1} parent=1 // pred_check
      _
    $region39: #{lenet5_forward.1} parent=1 // pred_check_branch
      %43 = sbr.rel (0) target = $region41
    $region40: #{lenet5_forward.1} parent=1 // pred_region
      _
    $region41: #{lenet5_forward.1} parent=1 // pred_fallthru
      _
    // Predicated region
    $region42: #{lenet5_forward.1} parent=1 // pred_check
      _
    $region43: #{lenet5_forward.1} parent=1 // pred_check_branch
      %45 = sbr.rel (0) target = $region45
    $region44: #{lenet5_forward.1} parent=1 // pred_region
      _
    $region45: #{lenet5_forward.1} parent=1 // pred_fallthru
      _
    // Predicated region
    $region46: #{lenet5_forward.1} parent=1 // pred_check
      _
    $region47: #{lenet5_forward.1} parent=1 // pred_check_branch
      %47 = sbr.rel (0) target = $region49
    $region48: #{lenet5_forward.1} parent=1 // pred_region
      _
    $region49: #{lenet5_forward.1} parent=1 // pred_fallthru
      _
    // Predicated region
    $region50: #{lenet5_forward.1} parent=1 // pred_check
      _
    $region51: #{lenet5_forward.1} parent=1 // pred_check_branch
      %49 = sbr.rel (0) target = $region53
    $region52: #{lenet5_forward.1} parent=1 // pred_region
      _
    $region53: #{lenet5_forward.1} parent=1 // pred_fallthru
      _
    // Predicated region
    $region54: #{lenet5_forward.1} parent=1 // pred_check
      _
    $region55: #{lenet5_forward.1} parent=1 // pred_check_branch
      %51 = sbr.rel (0) target = $region57
    $region56: #{lenet5_forward.1} parent=1 // pred_region
      _
    $region57: #{lenet5_forward.1} parent=1 // pred_fallthru
      _
    // Predicated region
    $region58: #{lenet5_forward.1} parent=1 // pred_check
      _
    $region59: #{lenet5_forward.1} parent=1 // pred_check_branch
      %53 = sbr.rel (0) target = $region61
    $region60: #{lenet5_forward.1} parent=1 // pred_region
      _
    $region61: #{lenet5_forward.1} parent=1 // pred_fallthru
      _
    %v54 = vld [vmem:[%s0] sm:$0xff]
    %v55 = vld [vmem:[%s0 + $0x8] sm:$0xff]
    %v56 = vld [vmem:[%s0 + $0x10] sm:$0xff]
    %v57 = vld [vmem:[%s0 + $0x18] sm:$0xff]
    %v58 = vld [vmem:[%s0 + $0x20] sm:$0xff]
    %v59 = vld [vmem:[%s0 + $0x28] sm:$0xff]
    %v60 = vld [vmem:[%s0 + $0x30] sm:$0xff]
    %v61 = vld [vmem:[%s0 + $0x38] sm:$0xff]
    %v62 = vld [vmem:[%s0 + $0x40] sm:$0xf]
    %v63 = vld [vmem:[%s1] sm:$0xff]
    %v64 = vld [vmem:[%s1 + $0x8] sm:$0xff]
    %v65 = vld [vmem:[%s1 + $0x10] sm:$0xff]
    %v66 = vld [vmem:[%s1 + $0x18] sm:$0xff]
    %v67 = vld [vmem:[%s1 + $0x20] sm:$0xff]
    %v68 = vld [vmem:[%s1 + $0x28] sm:$0xff]
    %v69 = vld [vmem:[%s1 + $0x30] sm:$0xff]
    %v70 = vld [vmem:[%s1 + $0x38] sm:$0xff]
    %s71 = scalar_lea.vmem %s1, 64
    %v72 = vld [vmem:[%s71] sm:$0xff]
    %v73 = vld [vmem:[%s71 + $0x8] sm:$0xff]
    %v74 = vld [vmem:[%s71 + $0x10] sm:$0xff]
    %v75 = vld [vmem:[%s71 + $0x18] sm:$0xff]
    %v76 = vld [vmem:[%s71 + $0x20] sm:$0xff]
    %v77 = vld [vmem:[%s71 + $0x28] sm:$0xff]
    %v78 = vld [vmem:[%s71 + $0x30] sm:$0xff]
    %v79 = vld [vmem:[%s71 + $0x38] sm:$0xff]
    %vm89 = vcmask 1046528
    %v90 = vrot.slane %v54, 1
    %v91 = vrot.slane %v55, 1
    %v92 = vsel %vm89, %v90, %v91
    %v93 = vrot.slane %v56, 1
    %v94 = vsel %vm89, %v91, %v93
    %v95 = vrot.slane %v57, 1
    %v96 = vsel %vm89, %v93, %v95
    %v97 = vrot.slane %v58, 1
    %v98 = vsel %vm89, %v95, %v97
    %v99 = vrot.slane %v59, 1
    %v100 = vsel %vm89, %v97, %v99
    %v101 = vrot.slane %v60, 1
    %v102 = vsel %vm89, %v99, %v101
    %v103 = vrot.slane %v61, 1
    %v104 = vsel %vm89, %v101, %v103
    %v105 = vrot.slane %v62, 1
    %v106 = vsel %vm89, %v103, %v105
    %vm107 = vcmask 261120
    %v108 = vsel %vm107, %v92, 0
    %v110 = vsel %vm107, %v94, 0
    %v112 = vsel %vm107, %v96, 0
    %v114 = vsel %vm107, %v98, 0
    %v116 = vsel %vm107, %v100, 0
    %v118 = vsel %vm107, %v102, 0
    %v120 = vsel %vm107, %v104, 0
    %v122 = vsel %vm107, %v106, 0
    %124 = vmatpush.msra.mxu0 0.0
    %125 = vmatpush.msra.mxu0 0.0
    %126 = vmatpush.msra.mxu0 0.0
    %127 = vmatpush.msra.mxu0 0.0
    %128 = vmatpush.msra.mxu0 0.0
    %129 = vmatpush.msra.mxu0 0.0
    %130 = vmatpush.msra.mxu0 0.0
    %131 = vmatpush.msra.mxu0 0.0
    %132 = vmatpush.msra.mxu0 0.0
    %133 = vmatpush.msra.mxu0 0.0
    %134 = vmatpush.msra.mxu0 0.0
    %135 = vmatpush.msra.mxu0 0.0
    %136 = vmatpush.msra.mxu0 %v78
    %137 = vmatpush.msra.mxu0 %v76
    %138 = vmatpush.msra.mxu0 %v74
    %139 = vmatpush.msra.mxu0 %v72
    %140 = vmatmul.f32.gmra.mxu0 %v108
    %v141 = vpop.f32.mrf.mxu0
    %v142 = vadd.f32 0.0, %v141
    %143 = vmatmul.f32.gmra.mxu0 %v110
    %v144 = vpop.f32.mrf.mxu0
    %v145 = vadd.f32 0.0, %v144
    %146 = vmatmul.f32.gmra.mxu0 %v112
    %v147 = vpop.f32.mrf.mxu0
    %v148 = vadd.f32 0.0, %v147
    %149 = vmatmul.f32.gmra.mxu0 %v114
    %v150 = vpop.f32.mrf.mxu0
    %v151 = vadd.f32 0.0, %v150
    %152 = vmatmul.f32.gmra.mxu0 %v116
    %v153 = vpop.f32.mrf.mxu0
    %v154 = vadd.f32 0.0, %v153
    %155 = vmatmul.f32.gmra.mxu0 %v118
    %v156 = vpop.f32.mrf.mxu0
    %v157 = vadd.f32 0.0, %v156
    %158 = vmatmul.f32.gmra.mxu0 %v120
    %v159 = vpop.f32.mrf.mxu0
    %v160 = vadd.f32 0.0, %v159
    %161 = vmatmul.f32.gmra.mxu0 %v122
    %v162 = vpop.f32.mrf.mxu0
    %v163 = vadd.f32 0.0, %v162
    %164 = vdwg.mxu0
    %165 = vmatpush.msra.mxu0 0.0
    %166 = vmatpush.msra.mxu0 0.0
    %167 = vmatpush.msra.mxu0 0.0
    %168 = vmatpush.msra.mxu0 0.0
    %169 = vmatpush.msra.mxu0 0.0
    %170 = vmatpush.msra.mxu0 0.0
    %171 = vmatpush.msra.mxu0 0.0
    %172 = vmatpush.msra.mxu0 0.0
    %173 = vmatpush.msra.mxu0 0.0
    %174 = vmatpush.msra.mxu0 0.0
    %175 = vmatpush.msra.mxu0 0.0
    %176 = vmatpush.msra.mxu0 0.0
    %177 = vmatpush.msra.mxu0 %v79
    %178 = vmatpush.msra.mxu0 %v77
    %179 = vmatpush.msra.mxu0 %v75
    %180 = vmatpush.msra.mxu0 %v73
    %181 = vmatmul.f32.gmra.mxu0 %v108
    %v182 = vpop.f32.mrf.mxu0
    %v183 = vadd.f32 0.0, %v182
    %184 = vmatmul.f32.gmra.mxu0 %v110
    %v185 = vpop.f32.mrf.mxu0
    %v186 = vadd.f32 0.0, %v185
    %187 = vmatmul.f32.gmra.mxu0 %v112
    %v188 = vpop.f32.mrf.mxu0
    %v189 = vadd.f32 0.0, %v188
    %190 = vmatmul.f32.gmra.mxu0 %v114
    %v191 = vpop.f32.mrf.mxu0
    %v192 = vadd.f32 0.0, %v191
    %193 = vmatmul.f32.gmra.mxu0 %v116
    %v194 = vpop.f32.mrf.mxu0
    %v195 = vadd.f32 0.0, %v194
    %196 = vmatmul.f32.gmra.mxu0 %v118
    %v197 = vpop.f32.mrf.mxu0
    %v198 = vadd.f32 0.0, %v197
    %199 = vmatmul.f32.gmra.mxu0 %v120
    %v200 = vpop.f32.mrf.mxu0
    %v201 = vadd.f32 0.0, %v200
    %202 = vmatmul.f32.gmra.mxu0 %v122
    %v203 = vpop.f32.mrf.mxu0
    %v204 = vadd.f32 0.0, %v203
    %205 = vdwg.mxu0
    %v206 = vsel %vm107, %v54, 0
    %v208 = vsel %vm107, %v55, 0
    %v210 = vsel %vm107, %v56, 0
    %v212 = vsel %vm107, %v57, 0
    %v214 = vsel %vm107, %v58, 0
    %v216 = vsel %vm107, %v59, 0
    %v218 = vsel %vm107, %v60, 0
    %v220 = vsel %vm107, %v61, 0
    %222 = vmatpush.msra.mxu0 0.0
    %223 = vmatpush.msra.mxu0 0.0
    %224 = vmatpush.msra.mxu0 0.0
    %225 = vmatpush.msra.mxu0 0.0
    %226 = vmatpush.msra.mxu0 0.0
    %227 = vmatpush.msra.mxu0 0.0
    %228 = vmatpush.msra.mxu0 0.0
    %229 = vmatpush.msra.mxu0 0.0
    %230 = vmatpush.msra.mxu0 0.0
    %231 = vmatpush.msra.mxu0 0.0
    %232 = vmatpush.msra.mxu0 0.0
    %233 = vmatpush.msra.mxu0 0.0
    %234 = vmatpush.msra.mxu0 %v69
    %235 = vmatpush.msra.mxu0 %v67
    %236 = vmatpush.msra.mxu0 %v65
    %237 = vmatpush.msra.mxu0 %v63
    %238 = vmatmul.f32.gmra.mxu0 %v206
    %v239 = vpop.f32.mrf.mxu0
    %v240 = vadd.f32 %v142, %v239
    %241 = vmatmul.f32.gmra.mxu0 %v208
    %v242 = vpop.f32.mrf.mxu0
    %v243 = vadd.f32 %v145, %v242
    %244 = vmatmul.f32.gmra.mxu0 %v210
    %v245 = vpop.f32.mrf.mxu0
    %v246 = vadd.f32 %v148, %v245
    %247 = vmatmul.f32.gmra.mxu0 %v212
    %v248 = vpop.f32.mrf.mxu0
    %v249 = vadd.f32 %v151, %v248
    %250 = vmatmul.f32.gmra.mxu0 %v214
    %v251 = vpop.f32.mrf.mxu0
    %v252 = vadd.f32 %v154, %v251
    %253 = vmatmul.f32.gmra.mxu0 %v216
    %v254 = vpop.f32.mrf.mxu0
    %v255 = vadd.f32 %v157, %v254
    %256 = vmatmul.f32.gmra.mxu0 %v218
    %v257 = vpop.f32.mrf.mxu0
    %v258 = vadd.f32 %v160, %v257
    %259 = vmatmul.f32.gmra.mxu0 %v220
    %v260 = vpop.f32.mrf.mxu0
    %v261 = vadd.f32 %v163, %v260
    %262 = vdwg.mxu0
    %263 = vmatpush.msra.mxu0 0.0
    %264 = vmatpush.msra.mxu0 0.0
    %265 = vmatpush.msra.mxu0 0.0
    %266 = vmatpush.msra.mxu0 0.0
    %267 = vmatpush.msra.mxu0 0.0
    %268 = vmatpush.msra.mxu0 0.0
    %269 = vmatpush.msra.mxu0 0.0
    %270 = vmatpush.msra.mxu0 0.0
    %271 = vmatpush.msra.mxu0 0.0
    %272 = vmatpush.msra.mxu0 0.0
    %273 = vmatpush.msra.mxu0 0.0
    %274 = vmatpush.msra.mxu0 0.0
    %275 = vmatpush.msra.mxu0 %v70
    %276 = vmatpush.msra.mxu0 %v68
    %277 = vmatpush.msra.mxu0 %v66
    %278 = vmatpush.msra.mxu0 %v64
    %279 = vmatmul.f32.gmra.mxu0 %v206
    %v280 = vpop.f32.mrf.mxu0
    %v281 = vadd.f32 %v183, %v280
    %282 = vmatmul.f32.gmra.mxu0 %v208
    %v283 = vpop.f32.mrf.mxu0
    %v284 = vadd.f32 %v186, %v283
    %285 = vmatmul.f32.gmra.mxu0 %v210
    %v286 = vpop.f32.mrf.mxu0
    %v287 = vadd.f32 %v189, %v286
    %288 = vmatmul.f32.gmra.mxu0 %v212
    %v289 = vpop.f32.mrf.mxu0
    %v290 = vadd.f32 %v192, %v289
    %291 = vmatmul.f32.gmra.mxu0 %v214
    %v292 = vpop.f32.mrf.mxu0
    %v293 = vadd.f32 %v195, %v292
    %294 = vmatmul.f32.gmra.mxu0 %v216
    %v295 = vpop.f32.mrf.mxu0
    %v296 = vadd.f32 %v198, %v295
    %297 = vmatmul.f32.gmra.mxu0 %v218
    %v298 = vpop.f32.mrf.mxu0
    %v299 = vadd.f32 %v201, %v298
    %300 = vmatmul.f32.gmra.mxu0 %v220
    %v301 = vpop.f32.mrf.mxu0
    %v302 = vadd.f32 %v204, %v301
    %303 = vdwg.mxu0
    %s304 = scalar_lea.vmem %s1, 128
    %v305 = vld [vmem:[%s304] sm:$0xff]
    %v306 = vld [vmem:[%s304 + $0x8] sm:$0xff]
    %v307 = vld [vmem:[%s304 + $0x10] sm:$0xff]
    %v308 = vld [vmem:[%s304 + $0x18] sm:$0xff]
    %v309 = vld [vmem:[%s304 + $0x20] sm:$0xff]
    %v310 = vld [vmem:[%s304 + $0x28] sm:$0xff]
    %v311 = vld [vmem:[%s304 + $0x30] sm:$0xff]
    %v312 = vld [vmem:[%s304 + $0x38] sm:$0xff]
    %vm313 = vcmask 1045504
    %v314 = vrot.slane %v54, 2
    %v315 = vrot.slane %v55, 2
    %v316 = vsel %vm313, %v314, %v315
    %v317 = vrot.slane %v56, 2
    %v318 = vsel %vm313, %v315, %v317
    %v319 = vrot.slane %v57, 2
    %v320 = vsel %vm313, %v317, %v319
    %v321 = vrot.slane %v58, 2
    %v322 = vsel %vm313, %v319, %v321
    %v323 = vrot.slane %v59, 2
    %v324 = vsel %vm313, %v321, %v323
    %v325 = vrot.slane %v60, 2
    %v326 = vsel %vm313, %v323, %v325
    %v327 = vrot.slane %v61, 2
    %v328 = vsel %vm313, %v325, %v327
    %v329 = vrot.slane %v62, 2
    %v330 = vsel %vm313, %v327, %v329
    %v331 = vsel %vm107, %v316, 0
    %v333 = vsel %vm107, %v318, 0
    %v335 = vsel %vm107, %v320, 0
    %v337 = vsel %vm107, %v322, 0
    %v339 = vsel %vm107, %v324, 0
    %v341 = vsel %vm107, %v326, 0
    %v343 = vsel %vm107, %v328, 0
    %v345 = vsel %vm107, %v330, 0
    %347 = vmatpush.msra.mxu0 0.0
    %348 = vmatpush.msra.mxu0 0.0
    %349 = vmatpush.msra.mxu0 0.0
    %350 = vmatpush.msra.mxu0 0.0
    %351 = vmatpush.msra.mxu0 0.0
    %352 = vmatpush.msra.mxu0 0.0
    %353 = vmatpush.msra.mxu0 0.0
    %354 = vmatpush.msra.mxu0 0.0
    %355 = vmatpush.msra.mxu0 0.0
    %356 = vmatpush.msra.mxu0 0.0
    %357 = vmatpush.msra.mxu0 0.0
    %358 = vmatpush.msra.mxu0 0.0
    %359 = vmatpush.msra.mxu0 %v311
    %360 = vmatpush.msra.mxu0 %v309
    %361 = vmatpush.msra.mxu0 %v307
    %362 = vmatpush.msra.mxu0 %v305
    %363 = vmatmul.f32.gmra.mxu0 %v331
    %v364 = vpop.f32.mrf.mxu0
    %v365 = vadd.f32 0.0, %v364
    %366 = vmatmul.f32.gmra.mxu0 %v333
    %v367 = vpop.f32.mrf.mxu0
    %v368 = vadd.f32 0.0, %v367
    %369 = vmatmul.f32.gmra.mxu0 %v335
    %v370 = vpop.f32.mrf.mxu0
    %v371 = vadd.f32 0.0, %v370
    %372 = vmatmul.f32.gmra.mxu0 %v337
    %v373 = vpop.f32.mrf.mxu0
    %v374 = vadd.f32 0.0, %v373
    %375 = vmatmul.f32.gmra.mxu0 %v339
    %v376 = vpop.f32.mrf.mxu0
    %v377 = vadd.f32 0.0, %v376
    %378 = vmatmul.f32.gmra.mxu0 %v341
    %v379 = vpop.f32.mrf.mxu0
    %v380 = vadd.f32 0.0, %v379
    %381 = vmatmul.f32.gmra.mxu0 %v343
    %v382 = vpop.f32.mrf.mxu0
    %v383 = vadd.f32 0.0, %v382
    %384 = vmatmul.f32.gmra.mxu0 %v345
    %v385 = vpop.f32.mrf.mxu0
    %v386 = vadd.f32 0.0, %v385
    %387 = vdwg.mxu0
    %388 = vmatpush.msra.mxu0 0.0
    %389 = vmatpush.msra.mxu0 0.0
    %390 = vmatpush.msra.mxu0 0.0
    %391 = vmatpush.msra.mxu0 0.0
    %392 = vmatpush.msra.mxu0 0.0
    %393 = vmatpush.msra.mxu0 0.0
    %394 = vmatpush.msra.mxu0 0.0
    %395 = vmatpush.msra.mxu0 0.0
    %396 = vmatpush.msra.mxu0 0.0
    %397 = vmatpush.msra.mxu0 0.0
    %398 = vmatpush.msra.mxu0 0.0
    %399 = vmatpush.msra.mxu0 0.0
    %400 = vmatpush.msra.mxu0 %v312
    %401 = vmatpush.msra.mxu0 %v310
    %402 = vmatpush.msra.mxu0 %v308
    %403 = vmatpush.msra.mxu0 %v306
    %404 = vmatmul.f32.gmra.mxu0 %v331
    %v405 = vpop.f32.mrf.mxu0
    %v406 = vadd.f32 0.0, %v405
    %407 = vmatmul.f32.gmra.mxu0 %v333
    %v408 = vpop.f32.mrf.mxu0
    %v409 = vadd.f32 0.0, %v408
    %410 = vmatmul.f32.gmra.mxu0 %v335
    %v411 = vpop.f32.mrf.mxu0
    %v412 = vadd.f32 0.0, %v411
    %413 = vmatmul.f32.gmra.mxu0 %v337
    %v414 = vpop.f32.mrf.mxu0
    %v415 = vadd.f32 0.0, %v414
    %416 = vmatmul.f32.gmra.mxu0 %v339
    %v417 = vpop.f32.mrf.mxu0
    %v418 = vadd.f32 0.0, %v417
    %419 = vmatmul.f32.gmra.mxu0 %v341
    %v420 = vpop.f32.mrf.mxu0
    %v421 = vadd.f32 0.0, %v420
    %422 = vmatmul.f32.gmra.mxu0 %v343
    %v423 = vpop.f32.mrf.mxu0
    %v424 = vadd.f32 0.0, %v423
    %425 = vmatmul.f32.gmra.mxu0 %v345
    %v426 = vpop.f32.mrf.mxu0
    %v427 = vadd.f32 0.0, %v426
    %428 = vdwg.mxu0
    %v429 = vadd.f32 %v240, %v365
    %v430 = vadd.f32 %v281, %v406
    %v431 = vadd.f32 %v243, %v368
    %v432 = vadd.f32 %v284, %v409
    %v433 = vadd.f32 %v246, %v371
    %v434 = vadd.f32 %v287, %v412
    %v435 = vadd.f32 %v249, %v374
    %v436 = vadd.f32 %v290, %v415
    %v437 = vadd.f32 %v252, %v377
    %v438 = vadd.f32 %v293, %v418
    %v439 = vadd.f32 %v255, %v380
    %v440 = vadd.f32 %v296, %v421
    %v441 = vadd.f32 %v258, %v383
    %v442 = vadd.f32 %v299, %v424
    %v443 = vadd.f32 %v261, %v386
    %v444 = vadd.f32 %v302, %v427
    %s445 = scalar_lea.vmem %s1, 192
    %v446 = vld [vmem:[%s445] sm:$0xff]
    %v447 = vld [vmem:[%s445 + $0x8] sm:$0xff]
    %v448 = vld [vmem:[%s445 + $0x10] sm:$0xff]
    %v449 = vld [vmem:[%s445 + $0x18] sm:$0xff]
    %v450 = vld [vmem:[%s445 + $0x20] sm:$0xff]
    %v451 = vld [vmem:[%s445 + $0x28] sm:$0xff]
    %v452 = vld [vmem:[%s445 + $0x30] sm:$0xff]
    %v453 = vld [vmem:[%s445 + $0x38] sm:$0xff]
    %vm454 = vcmask 1044480
    %v455 = vrot.slane %v54, 3
    %v456 = vrot.slane %v55, 3
    %v457 = vsel %vm454, %v455, %v456
    %v458 = vrot.slane %v56, 3
    %v459 = vsel %vm454, %v456, %v458
    %v460 = vrot.slane %v57, 3
    %v461 = vsel %vm454, %v458, %v460
    %v462 = vrot.slane %v58, 3
    %v463 = vsel %vm454, %v460, %v462
    %v464 = vrot.slane %v59, 3
    %v465 = vsel %vm454, %v462, %v464
    %v466 = vrot.slane %v60, 3
    %v467 = vsel %vm454, %v464, %v466
    %v468 = vrot.slane %v61, 3
    %v469 = vsel %vm454, %v466, %v468
    %v470 = vrot.slane %v62, 3
    %v471 = vsel %vm454, %v468, %v470
    %v472 = vsel %vm107, %v457, 0
    %v474 = vsel %vm107, %v459, 0
    %v476 = vsel %vm107, %v461, 0
    %v478 = vsel %vm107, %v463, 0
    %v480 = vsel %vm107, %v465, 0
    %v482 = vsel %vm107, %v467, 0
    %v484 = vsel %vm107, %v469, 0
    %v486 = vsel %vm107, %v471, 0
    %488 = vmatpush.msra.mxu0 0.0
    %489 = vmatpush.msra.mxu0 0.0
    %490 = vmatpush.msra.mxu0 0.0
    %491 = vmatpush.msra.mxu0 0.0
    %492 = vmatpush.msra.mxu0 0.0
    %493 = vmatpush.msra.mxu0 0.0
    %494 = vmatpush.msra.mxu0 0.0
    %495 = vmatpush.msra.mxu0 0.0
    %496 = vmatpush.msra.mxu0 0.0
    %497 = vmatpush.msra.mxu0 0.0
    %498 = vmatpush.msra.mxu0 0.0
    %499 = vmatpush.msra.mxu0 0.0
    %500 = vmatpush.msra.mxu0 %v452
    %501 = vmatpush.msra.mxu0 %v450
    %502 = vmatpush.msra.mxu0 %v448
    %503 = vmatpush.msra.mxu0 %v446
    %504 = vmatmul.f32.gmra.mxu0 %v472
    %v505 = vpop.f32.mrf.mxu0
    %v506 = vadd.f32 0.0, %v505
    %507 = vmatmul.f32.gmra.mxu0 %v474
    %v508 = vpop.f32.mrf.mxu0
    %v509 = vadd.f32 0.0, %v508
    %510 = vmatmul.f32.gmra.mxu0 %v476
    %v511 = vpop.f32.mrf.mxu0
    %v512 = vadd.f32 0.0, %v511
    %513 = vmatmul.f32.gmra.mxu0 %v478
    %v514 = vpop.f32.mrf.mxu0
    %v515 = vadd.f32 0.0, %v514
    %516 = vmatmul.f32.gmra.mxu0 %v480
    %v517 = vpop.f32.mrf.mxu0
    %v518 = vadd.f32 0.0, %v517
    %519 = vmatmul.f32.gmra.mxu0 %v482
    %v520 = vpop.f32.mrf.mxu0
    %v521 = vadd.f32 0.0, %v520
    %522 = vmatmul.f32.gmra.mxu0 %v484
    %v523 = vpop.f32.mrf.mxu0
    %v524 = vadd.f32 0.0, %v523
    %525 = vmatmul.f32.gmra.mxu0 %v486
    %v526 = vpop.f32.mrf.mxu0
    %v527 = vadd.f32 0.0, %v526
    %528 = vdwg.mxu0
    %529 = vmatpush.msra.mxu0 0.0
    %530 = vmatpush.msra.mxu0 0.0
    %531 = vmatpush.msra.mxu0 0.0
    %532 = vmatpush.msra.mxu0 0.0
    %533 = vmatpush.msra.mxu0 0.0
    %534 = vmatpush.msra.mxu0 0.0
    %535 = vmatpush.msra.mxu0 0.0
    %536 = vmatpush.msra.mxu0 0.0
    %537 = vmatpush.msra.mxu0 0.0
    %538 = vmatpush.msra.mxu0 0.0
    %539 = vmatpush.msra.mxu0 0.0
    %540 = vmatpush.msra.mxu0 0.0
    %541 = vmatpush.msra.mxu0 %v453
    %542 = vmatpush.msra.mxu0 %v451
    %543 = vmatpush.msra.mxu0 %v449
    %544 = vmatpush.msra.mxu0 %v447
    %545 = vmatmul.f32.gmra.mxu0 %v472
    %v546 = vpop.f32.mrf.mxu0
    %v547 = vadd.f32 0.0, %v546
    %548 = vmatmul.f32.gmra.mxu0 %v474
    %v549 = vpop.f32.mrf.mxu0
    %v550 = vadd.f32 0.0, %v549
    %551 = vmatmul.f32.gmra.mxu0 %v476
    %v552 = vpop.f32.mrf.mxu0
    %v553 = vadd.f32 0.0, %v552
    %554 = vmatmul.f32.gmra.mxu0 %v478
    %v555 = vpop.f32.mrf.mxu0
    %v556 = vadd.f32 0.0, %v555
    %557 = vmatmul.f32.gmra.mxu0 %v480
    %v558 = vpop.f32.mrf.mxu0
    %v559 = vadd.f32 0.0, %v558
    %560 = vmatmul.f32.gmra.mxu0 %v482
    %v561 = vpop.f32.mrf.mxu0
    %v562 = vadd.f32 0.0, %v561
    %563 = vmatmul.f32.gmra.mxu0 %v484
    %v564 = vpop.f32.mrf.mxu0
    %v565 = vadd.f32 0.0, %v564
    %566 = vmatmul.f32.gmra.mxu0 %v486
    %v567 = vpop.f32.mrf.mxu0
    %v568 = vadd.f32 0.0, %v567
    %569 = vdwg.mxu0
    %v570 = vadd.f32 %v429, %v506
    %v571 = vadd.f32 %v430, %v547
    %v572 = vadd.f32 %v431, %v509
    %v573 = vadd.f32 %v432, %v550
    %v574 = vadd.f32 %v433, %v512
    %v575 = vadd.f32 %v434, %v553
    %v576 = vadd.f32 %v435, %v515
    %v577 = vadd.f32 %v436, %v556
    %v578 = vadd.f32 %v437, %v518
    %v579 = vadd.f32 %v438, %v559
    %v580 = vadd.f32 %v439, %v521
    %v581 = vadd.f32 %v440, %v562
    %v582 = vadd.f32 %v441, %v524
    %v583 = vadd.f32 %v442, %v565
    %v584 = vadd.f32 %v443, %v527
    %v585 = vadd.f32 %v444, %v568
    %s586 = scalar_lea.vmem %s1, 256
    %v587 = vld [vmem:[%s586] sm:$0xff]
    %v588 = vld [vmem:[%s586 + $0x8] sm:$0xff]
    %v589 = vld [vmem:[%s586 + $0x10] sm:$0xff]
    %v590 = vld [vmem:[%s586 + $0x18] sm:$0xff]
    %v591 = vld [vmem:[%s586 + $0x20] sm:$0xff]
    %v592 = vld [vmem:[%s586 + $0x28] sm:$0xff]
    %v593 = vld [vmem:[%s586 + $0x30] sm:$0xff]
    %v594 = vld [vmem:[%s586 + $0x38] sm:$0xff]
    %vm595 = vcmask 1043456
    %v596 = vrot.slane %v54, 4
    %v597 = vrot.slane %v55, 4
    %v598 = vsel %vm595, %v596, %v597
    %v599 = vrot.slane %v56, 4
    %v600 = vsel %vm595, %v597, %v599
    %v601 = vrot.slane %v57, 4
    %v602 = vsel %vm595, %v599, %v601
    %v603 = vrot.slane %v58, 4
    %v604 = vsel %vm595, %v601, %v603
    %v605 = vrot.slane %v59, 4
    %v606 = vsel %vm595, %v603, %v605
    %v607 = vrot.slane %v60, 4
    %v608 = vsel %vm595, %v605, %v607
    %v609 = vrot.slane %v61, 4
    %v610 = vsel %vm595, %v607, %v609
    %v611 = vrot.slane %v62, 4
    %v612 = vsel %vm595, %v609, %v611
    %v613 = vsel %vm107, %v598, 0
    %v615 = vsel %vm107, %v600, 0
    %v617 = vsel %vm107, %v602, 0
    %v619 = vsel %vm107, %v604, 0
    %v621 = vsel %vm107, %v606, 0
    %v623 = vsel %vm107, %v608, 0
    %v625 = vsel %vm107, %v610, 0
    %v627 = vsel %vm107, %v612, 0
    %629 = vmatpush.msra.mxu0 0.0
    %630 = vmatpush.msra.mxu0 0.0
    %631 = vmatpush.msra.mxu0 0.0
    %632 = vmatpush.msra.mxu0 0.0
    %633 = vmatpush.msra.mxu0 0.0
    %634 = vmatpush.msra.mxu0 0.0
    %635 = vmatpush.msra.mxu0 0.0
    %636 = vmatpush.msra.mxu0 0.0
    %637 = vmatpush.msra.mxu0 0.0
    %638 = vmatpush.msra.mxu0 0.0
    %639 = vmatpush.msra.mxu0 0.0
    %640 = vmatpush.msra.mxu0 0.0
    %641 = vmatpush.msra.mxu0 %v593
    %642 = vmatpush.msra.mxu0 %v591
    %643 = vmatpush.msra.mxu0 %v589
    %644 = vmatpush.msra.mxu0 %v587
    %645 = vmatmul.f32.gmra.mxu0 %v613
    %v646 = vpop.f32.mrf.mxu0
    %v647 = vadd.f32 0.0, %v646
    %648 = vmatmul.f32.gmra.mxu0 %v615
    %v649 = vpop.f32.mrf.mxu0
    %v650 = vadd.f32 0.0, %v649
    %651 = vmatmul.f32.gmra.mxu0 %v617
    %v652 = vpop.f32.mrf.mxu0
    %v653 = vadd.f32 0.0, %v652
    %654 = vmatmul.f32.gmra.mxu0 %v619
    %v655 = vpop.f32.mrf.mxu0
    %v656 = vadd.f32 0.0, %v655
    %657 = vmatmul.f32.gmra.mxu0 %v621
    %v658 = vpop.f32.mrf.mxu0
    %v659 = vadd.f32 0.0, %v658
    %660 = vmatmul.f32.gmra.mxu0 %v623
    %v661 = vpop.f32.mrf.mxu0
    %v662 = vadd.f32 0.0, %v661
    %663 = vmatmul.f32.gmra.mxu0 %v625
    %v664 = vpop.f32.mrf.mxu0
    %v665 = vadd.f32 0.0, %v664
    %666 = vmatmul.f32.gmra.mxu0 %v627
    %v667 = vpop.f32.mrf.mxu0
    %v668 = vadd.f32 0.0, %v667
    %669 = vdwg.mxu0
    %670 = vmatpush.msra.mxu0 0.0
    %671 = vmatpush.msra.mxu0 0.0
    %672 = vmatpush.msra.mxu0 0.0
    %673 = vmatpush.msra.mxu0 0.0
    %674 = vmatpush.msra.mxu0 0.0
    %675 = vmatpush.msra.mxu0 0.0
    %676 = vmatpush.msra.mxu0 0.0
    %677 = vmatpush.msra.mxu0 0.0
    %678 = vmatpush.msra.mxu0 0.0
    %679 = vmatpush.msra.mxu0 0.0
    %680 = vmatpush.msra.mxu0 0.0
    %681 = vmatpush.msra.mxu0 0.0
    %682 = vmatpush.msra.mxu0 %v594
    %683 = vmatpush.msra.mxu0 %v592
    %684 = vmatpush.msra.mxu0 %v590
    %685 = vmatpush.msra.mxu0 %v588
    %686 = vmatmul.f32.gmra.mxu0 %v613
    %v687 = vpop.f32.mrf.mxu0
    %v688 = vadd.f32 0.0, %v687
    %689 = vmatmul.f32.gmra.mxu0 %v615
    %v690 = vpop.f32.mrf.mxu0
    %v691 = vadd.f32 0.0, %v690
    %692 = vmatmul.f32.gmra.mxu0 %v617
    %v693 = vpop.f32.mrf.mxu0
    %v694 = vadd.f32 0.0, %v693
    %695 = vmatmul.f32.gmra.mxu0 %v619
    %v696 = vpop.f32.mrf.mxu0
    %v697 = vadd.f32 0.0, %v696
    %698 = vmatmul.f32.gmra.mxu0 %v621
    %v699 = vpop.f32.mrf.mxu0
    %v700 = vadd.f32 0.0, %v699
    %701 = vmatmul.f32.gmra.mxu0 %v623
    %v702 = vpop.f32.mrf.mxu0
    %v703 = vadd.f32 0.0, %v702
    %704 = vmatmul.f32.gmra.mxu0 %v625
    %v705 = vpop.f32.mrf.mxu0
    %v706 = vadd.f32 0.0, %v705
    %707 = vmatmul.f32.gmra.mxu0 %v627
    %v708 = vpop.f32.mrf.mxu0
    %v709 = vadd.f32 0.0, %v708
    %710 = vdwg.mxu0
    %v711 = vadd.f32 %v570, %v647
    %v712 = vadd.f32 %v571, %v688
    %v713 = vadd.f32 %v572, %v650
    %v714 = vadd.f32 %v573, %v691
    %v715 = vadd.f32 %v574, %v653
    %v716 = vadd.f32 %v575, %v694
    %v717 = vadd.f32 %v576, %v656
    %v718 = vadd.f32 %v577, %v697
    %v719 = vadd.f32 %v578, %v659
    %v720 = vadd.f32 %v579, %v700
    %v721 = vadd.f32 %v580, %v662
    %v722 = vadd.f32 %v581, %v703
    %v723 = vadd.f32 %v582, %v665
    %v724 = vadd.f32 %v583, %v706
    %v725 = vadd.f32 %v584, %v668
    %v726 = vadd.f32 %v585, %v709
    %v727 = vld [vmem:[%s2] sm:$0x3]
    %v729 = vperm.slane %v727, 0
    %v730 = vperm.slane %v727, 1
    %v733 = vadd.f32 %v711, %v729
    %v734 = vadd.f32 %v712, %v730
    %v735 = vadd.f32 %v713, %v729
    %v736 = vadd.f32 %v714, %v730
    %v737 = vadd.f32 %v715, %v729
    %v738 = vadd.f32 %v716, %v730
    %v739 = vadd.f32 %v717, %v729
    %v740 = vadd.f32 %v718, %v730
    %v741 = vadd.f32 %v719, %v729
    %v742 = vadd.f32 %v720, %v730
    %v743 = vadd.f32 %v721, %v729
    %v744 = vadd.f32 %v722, %v730
    %v745 = vadd.f32 %v723, %v729
    %v746 = vadd.f32 %v724, %v730
    %v747 = vadd.f32 %v725, %v729
    %v748 = vadd.f32 %v726, %v730
    %v749 = vtanh.pop %v733
    %v750 = vtanh.pop %v734
    %v751 = vtanh.pop %v735
    %v752 = vtanh.pop %v736
    %v753 = vtanh.pop %v737
    %v754 = vtanh.pop %v738
    %v755 = vtanh.pop %v739
    %v756 = vtanh.pop %v740
    %v757 = vtanh.pop %v741
    %v758 = vtanh.pop %v742
    %v759 = vtanh.pop %v743
    %v760 = vtanh.pop %v744
    %v761 = vtanh.pop %v745
    %v762 = vtanh.pop %v746
    %v763 = vtanh.pop %v747
    %v764 = vtanh.pop %v748
    %v765 = vld [vmem:[%s4] sm:$0xff]
    %v766 = vld [vmem:[%s4 + $0x8] sm:$0xff]
    %v767 = vld [vmem:[%s4 + $0x10] sm:$0xff]
    %v768 = vld [vmem:[%s4 + $0x18] sm:$0xff]
    %v769 = vld [vmem:[%s3] sm:$0xff]
    %v770 = vld [vmem:[%s3 + $0x8] sm:$0xff]
    %v771 = vld [vmem:[%s3 + $0x10] sm:$0xff]
    %v772 = vld [vmem:[%s3 + $0x18] sm:$0xff]
    %v773 = vld [vmem:[%s3 + $0x20] sm:$0xff]
    %v774 = vld [vmem:[%s3 + $0x28] sm:$0xff]
    %v775 = vld [vmem:[%s3 + $0x30] sm:$0xff]
    %v776 = vld [vmem:[%s3 + $0x38] sm:$0xff]
    %v777 = vld [vmem:[%s3 + $0x40] sm:$0xff]
    %v778 = vld [vmem:[%s3 + $0x48] sm:$0xff]
    %v779 = vld [vmem:[%s3 + $0x50] sm:$0xff]
    %v780 = vld [vmem:[%s3 + $0x58] sm:$0xff]
    %v781 = vld [vmem:[%s3 + $0x60] sm:$0xff]
    %v782 = vld [vmem:[%s3 + $0x68] sm:$0xff]
    %v783 = vld [vmem:[%s3 + $0x70] sm:$0xff]
    %v784 = vld [vmem:[%s3 + $0x78] sm:$0xff]
    %v785 = vld [vmem:[%s3 + $0x80] sm:$0xff]
    %v786 = vld [vmem:[%s3 + $0x88] sm:$0xff]
    %v787 = vld [vmem:[%s3 + $0x90] sm:$0xff]
    %v788 = vld [vmem:[%s3 + $0x98] sm:$0xff]
    %v789 = vld [vmem:[%s3 + $0xa0] sm:$0xff]
    %vm790 = vcmask 326656
    %v792 = vsel %vm790, %v750, 0
    %v795 = vsel %vm790, %v752, 0
    %v798 = vsel %vm790, %v754, 0
    %v801 = vsel %vm790, %v756, 0
    %v804 = vsel %vm790, %v758, 0
    %v807 = vsel %vm790, %v760, 0
    %v810 = vsel %vm790, %v762, 0
    %v813 = vsel %vm790, %v764, 0
    %815 = vmatpush.msra.mxu0 %v784
    %816 = vmatpush.msra.mxu0 %v783
    %817 = vmatpush.msra.mxu0 %v782
    %818 = vmatpush.msra.mxu0 %v781
    %819 = vmatpush.msra.mxu0 %v780
    %820 = vmatpush.msra.mxu0 %v779
    %821 = vmatpush.msra.mxu0 %v778
    %822 = vmatpush.msra.mxu0 %v777
    %823 = vmatpush.msra.mxu0 %v776
    %824 = vmatpush.msra.mxu0 %v775
    %825 = vmatpush.msra.mxu0 %v774
    %826 = vmatpush.msra.mxu0 %v773
    %827 = vmatpush.msra.mxu0 %v772
    %828 = vmatpush.msra.mxu0 %v771
    %829 = vmatpush.msra.mxu0 %v770
    %830 = vmatpush.msra.mxu0 %v769
    %831 = vmatmul.f32.gmra.mxu0 %v749
    %v832 = vpop.f32.mrf.mxu0
    %v833 = vadd.f32 0.0, %v832
    %834 = vmatmul.f32.gmra.mxu0 %v751
    %v835 = vpop.f32.mrf.mxu0
    %v836 = vadd.f32 0.0, %v835
    %837 = vmatmul.f32.gmra.mxu0 %v753
    %v838 = vpop.f32.mrf.mxu0
    %v839 = vadd.f32 0.0, %v838
    %840 = vmatmul.f32.gmra.mxu0 %v755
    %v841 = vpop.f32.mrf.mxu0
    %v842 = vadd.f32 0.0, %v841
    %843 = vmatmul.f32.gmra.mxu0 %v757
    %v844 = vpop.f32.mrf.mxu0
    %v845 = vadd.f32 0.0, %v844
    %846 = vmatmul.f32.gmra.mxu0 %v759
    %v847 = vpop.f32.mrf.mxu0
    %v848 = vadd.f32 0.0, %v847
    %849 = vmatmul.f32.gmra.mxu0 %v761
    %v850 = vpop.f32.mrf.mxu0
    %v851 = vadd.f32 0.0, %v850
    %852 = vmatmul.f32.gmra.mxu0 %v763
    %v853 = vpop.f32.mrf.mxu0
    %v854 = vadd.f32 0.0, %v853
    %855 = vdwg.mxu0
    %856 = vmatpush.msra.mxu0 0.0
    %857 = vmatpush.msra.mxu0 0.0
    %858 = vmatpush.msra.mxu0 0.0
    %859 = vmatpush.msra.mxu0 0.0
    %860 = vmatpush.msra.mxu0 0.0
    %861 = vmatpush.msra.mxu0 0.0
    %862 = vmatpush.msra.mxu0 0.0
    %863 = vmatpush.msra.mxu0 0.0
    %864 = vmatpush.msra.mxu0 0.0
    %865 = vmatpush.msra.mxu0 0.0
    %866 = vmatpush.msra.mxu0 0.0
    %867 = vmatpush.msra.mxu0 %v789
    %868 = vmatpush.msra.mxu0 %v788
    %869 = vmatpush.msra.mxu0 %v787
    %870 = vmatpush.msra.mxu0 %v786
    %871 = vmatpush.msra.mxu0 %v785
    %872 = vmatmul.f32.gmra.mxu0 %v792
    %v873 = vpop.f32.mrf.mxu0
    %v874 = vadd.f32 %v833, %v873
    %875 = vmatmul.f32.gmra.mxu0 %v795
    %v876 = vpop.f32.mrf.mxu0
    %v877 = vadd.f32 %v836, %v876
    %878 = vmatmul.f32.gmra.mxu0 %v798
    %v879 = vpop.f32.mrf.mxu0
    %v880 = vadd.f32 %v839, %v879
    %881 = vmatmul.f32.gmra.mxu0 %v801
    %v882 = vpop.f32.mrf.mxu0
    %v883 = vadd.f32 %v842, %v882
    %884 = vmatmul.f32.gmra.mxu0 %v804
    %v885 = vpop.f32.mrf.mxu0
    %v886 = vadd.f32 %v845, %v885
    %887 = vmatmul.f32.gmra.mxu0 %v807
    %v888 = vpop.f32.mrf.mxu0
    %v889 = vadd.f32 %v848, %v888
    %890 = vmatmul.f32.gmra.mxu0 %v810
    %v891 = vpop.f32.mrf.mxu0
    %v892 = vadd.f32 %v851, %v891
    %893 = vmatmul.f32.gmra.mxu0 %v813
    %v894 = vpop.f32.mrf.mxu0
    %v895 = vadd.f32 %v854, %v894
    %896 = vdwg.mxu0
    %vm897 = vcmask 523264
    %v899 = vsel %vm897, %v765, 0
    %v902 = vsel %vm897, %v766, 0
    %v905 = vsel %vm897, %v767, 0
    %v908 = vsel %vm897, %v768, 0
    %910 = vmatpush.msra.mxu0 0.0
    %911 = vmatpush.msra.mxu0 0.0
    %912 = vmatpush.msra.mxu0 0.0
    %913 = vmatpush.msra.mxu0 0.0
    %914 = vmatpush.msra.mxu0 0.0
    %915 = vmatpush.msra.mxu0 0.0
    %916 = vmatpush.msra.mxu0 0.0
    %917 = vmatpush.msra.mxu0 0.0
    %918 = vmatpush.msra.mxu0 %v895
    %919 = vmatpush.msra.mxu0 %v892
    %920 = vmatpush.msra.mxu0 %v889
    %921 = vmatpush.msra.mxu0 %v886
    %922 = vmatpush.msra.mxu0 %v883
    %923 = vmatpush.msra.mxu0 %v880
    %924 = vmatpush.msra.mxu0 %v877
    %925 = vmatpush.msra.mxu0 %v874
    %926 = vmatmul.f32.gmra.mxu0 %v899
    %v927 = vpop.f32.mrf.mxu0
    %v928 = vadd.f32 0.0, %v927
    %929 = vmatmul.f32.gmra.mxu0 %v902
    %v930 = vpop.f32.mrf.mxu0
    %v931 = vadd.f32 0.0, %v930
    %932 = vmatmul.f32.gmra.mxu0 %v905
    %v933 = vpop.f32.mrf.mxu0
    %v934 = vadd.f32 0.0, %v933
    %935 = vmatmul.f32.gmra.mxu0 %v908
    %v936 = vpop.f32.mrf.mxu0
    %v937 = vadd.f32 0.0, %v936
    %938 = vdwg.mxu0
    %v939 = vld [vmem:[%s5] sm:$0xff]
    %v940 = vld [vmem:[%s5 + $0x8] sm:$0xff]
    %v941 = vld [vmem:[%s5 + $0x10] sm:$0xff]
    %v942 = vld [vmem:[%s5 + $0x18] sm:$0xff]
    %v943 = vld [vmem:[%s5 + $0x20] sm:$0xff]
    %v944 = vld [vmem:[%s5 + $0x28] sm:$0xff]
    %v945 = vld [vmem:[%s5 + $0x30] sm:$0xff]
    %v946 = vld [vmem:[%s5 + $0x38] sm:$0xff]
    %v947 = vld [vmem:[%s5 + $0x40] sm:$0xff]
    %v948 = vld [vmem:[%s5 + $0x48] sm:$0xff]
    %v949 = vld [vmem:[%s5 + $0x50] sm:$0xff]
    %v950 = vld [vmem:[%s5 + $0x58] sm:$0xff]
    %v951 = vld [vmem:[%s5 + $0x60] sm:$0xff]
    %v952 = vld [vmem:[%s5 + $0x68] sm:$0xff]
    %v953 = vld [vmem:[%s5 + $0x70] sm:$0xff]
    %v954 = vld [vmem:[%s5 + $0x78] sm:$0xff]
    %v955 = vld [vmem:[%s5 + $0x80] sm:$0xff]
    %v956 = vld [vmem:[%s5 + $0x88] sm:$0xff]
    %v957 = vld [vmem:[%s5 + $0x90] sm:$0xff]
    %v958 = vld [vmem:[%s5 + $0x98] sm:$0xff]
    %v959 = vld [vmem:[%s5 + $0xa0] sm:$0xf]
    %v960 = vld [vmem:[%s5 + $0xa8] sm:$0xf]
    %s961 = scalar_lea.vmem %s5, 176
    %v962 = vld [vmem:[%s961] sm:$0xff]
    %v963 = vld [vmem:[%s961 + $0x8] sm:$0xff]
    %v964 = vld [vmem:[%s961 + $0x10] sm:$0xff]
    %v965 = vld [vmem:[%s961 + $0x18] sm:$0xff]
    %v966 = vld [vmem:[%s961 + $0x20] sm:$0xff]
    %v967 = vld [vmem:[%s961 + $0x28] sm:$0xff]
    %v968 = vld [vmem:[%s961 + $0x30] sm:$0xff]
    %v969 = vld [vmem:[%s961 + $0x38] sm:$0xff]
    %v970 = vld [vmem:[%s961 + $0x40] sm:$0xff]
    %v971 = vld [vmem:[%s961 + $0x48] sm:$0xff]
    %v972 = vld [vmem:[%s961 + $0x50] sm:$0xff]
    %v973 = vld [vmem:[%s961 + $0x58] sm:$0xff]
    %v974 = vld [vmem:[%s961 + $0x60] sm:$0xff]
    %v975 = vld [vmem:[%s961 + $0x68] sm:$0xff]
    %v976 = vld [vmem:[%s961 + $0x70] sm:$0xff]
    %v977 = vld [vmem:[%s961 + $0x78] sm:$0xff]
    %v978 = vld [vmem:[%s961 + $0x80] sm:$0xff]
    %v979 = vld [vmem:[%s961 + $0x88] sm:$0xff]
    %v980 = vld [vmem:[%s961 + $0x90] sm:$0xff]
    %v981 = vld [vmem:[%s961 + $0x98] sm:$0xff]
    %v982 = vld [vmem:[%s961 + $0xa0] sm:$0xf]
    %v983 = vld [vmem:[%s961 + $0xa8] sm:$0xf]
    %v988 = vrot.slane %v928, 1
    %v989 = vrot.slane %v931, 1
    %v990 = vsel %vm89, %v988, %v989
    %v991 = vrot.slane %v934, 1
    %v992 = vsel %vm89, %v989, %v991
    %v993 = vrot.slane %v937, 1
    %v994 = vsel %vm89, %v991, %v993
    %vm995 = vcmask 687104
    %v996 = vsel %vm995, %v990, 0
    %v998 = vsel %vm995, %v992, 0
    %v1000 = vsel %vm995, %v994, 0
    %v1002 = vsel %vm995, %v993, 0
    %v1005 = vsel %vm595, %v982, 0
    %v1008 = vsel %vm595, %v983, 0
    %1010 = vmatpush.msra.mxu0 0.0
    %1011 = vmatpush.msra.mxu0 0.0
    %1012 = vmatpush.msra.mxu0 0.0
    %1013 = vmatpush.msra.mxu0 0.0
    %1014 = vmatpush.msra.mxu0 0.0
    %1015 = vmatpush.msra.mxu0 %v1005
    %1016 = vmatpush.msra.mxu0 %v980
    %1017 = vmatpush.msra.mxu0 %v978
    %1018 = vmatpush.msra.mxu0 %v976
    %1019 = vmatpush.msra.mxu0 %v974
    %1020 = vmatpush.msra.mxu0 %v972
    %1021 = vmatpush.msra.mxu0 %v970
    %1022 = vmatpush.msra.mxu0 %v968
    %1023 = vmatpush.msra.mxu0 %v966
    %1024 = vmatpush.msra.mxu0 %v964
    %1025 = vmatpush.msra.mxu0 %v962
    %1026 = vmatmul.f32.gmra.mxu0 %v996
    %v1027 = vpop.f32.mrf.mxu0
    %v1028 = vadd.f32 0.0, %v1027
    %1029 = vmatmul.f32.gmra.mxu0 %v998
    %v1030 = vpop.f32.mrf.mxu0
    %v1031 = vadd.f32 0.0, %v1030
    %1032 = vmatmul.f32.gmra.mxu0 %v1000
    %v1033 = vpop.f32.mrf.mxu0
    %v1034 = vadd.f32 0.0, %v1033
    %1035 = vmatmul.f32.gmra.mxu0 %v1002
    %v1036 = vpop.f32.mrf.mxu0
    %v1037 = vadd.f32 0.0, %v1036
    %1038 = vdwg.mxu0
    %1039 = vmatpush.msra.mxu0 0.0
    %1040 = vmatpush.msra.mxu0 0.0
    %1041 = vmatpush.msra.mxu0 0.0
    %1042 = vmatpush.msra.mxu0 0.0
    %1043 = vmatpush.msra.mxu0 0.0
    %1044 = vmatpush.msra.mxu0 %v1008
    %1045 = vmatpush.msra.mxu0 %v981
    %1046 = vmatpush.msra.mxu0 %v979
    %1047 = vmatpush.msra.mxu0 %v977
    %1048 = vmatpush.msra.mxu0 %v975
    %1049 = vmatpush.msra.mxu0 %v973
    %1050 = vmatpush.msra.mxu0 %v971
    %1051 = vmatpush.msra.mxu0 %v969
    %1052 = vmatpush.msra.mxu0 %v967
    %1053 = vmatpush.msra.mxu0 %v965
    %1054 = vmatpush.msra.mxu0 %v963
    %1055 = vmatmul.f32.gmra.mxu0 %v996
    %v1056 = vpop.f32.mrf.mxu0
    %v1057 = vadd.f32 0.0, %v1056
    %1058 = vmatmul.f32.gmra.mxu0 %v998
    %v1059 = vpop.f32.mrf.mxu0
    %v1060 = vadd.f32 0.0, %v1059
    %1061 = vmatmul.f32.gmra.mxu0 %v1000
    %v1062 = vpop.f32.mrf.mxu0
    %v1063 = vadd.f32 0.0, %v1062
    %1064 = vmatmul.f32.gmra.mxu0 %v1002
    %v1065 = vpop.f32.mrf.mxu0
    %v1066 = vadd.f32 0.0, %v1065
    %1067 = vdwg.mxu0
    %v1068 = vsel %vm995, %v928, 0
    %v1070 = vsel %vm995, %v931, 0
    %v1072 = vsel %vm995, %v934, 0
    %v1074 = vsel %vm995, %v937, 0
    %v1077 = vsel %vm595, %v959, 0
    %v1080 = vsel %vm595, %v960, 0
    %1082 = vmatpush.msra.mxu0 0.0
    %1083 = vmatpush.msra.mxu0 0.0
    %1084 = vmatpush.msra.mxu0 0.0
    %1085 = vmatpush.msra.mxu0 0.0
    %1086 = vmatpush.msra.mxu0 0.0
    %1087 = vmatpush.msra.mxu0 %v1077
    %1088 = vmatpush.msra.mxu0 %v957
    %1089 = vmatpush.msra.mxu0 %v955
    %1090 = vmatpush.msra.mxu0 %v953
    %1091 = vmatpush.msra.mxu0 %v951
    %1092 = vmatpush.msra.mxu0 %v949
    %1093 = vmatpush.msra.mxu0 %v947
    %1094 = vmatpush.msra.mxu0 %v945
    %1095 = vmatpush.msra.mxu0 %v943
    %1096 = vmatpush.msra.mxu0 %v941
    %1097 = vmatpush.msra.mxu0 %v939
    %1098 = vmatmul.f32.gmra.mxu0 %v1068
    %v1099 = vpop.f32.mrf.mxu0
    %v1100 = vadd.f32 %v1028, %v1099
    %1101 = vmatmul.f32.gmra.mxu0 %v1070
    %v1102 = vpop.f32.mrf.mxu0
    %v1103 = vadd.f32 %v1031, %v1102
    %1104 = vmatmul.f32.gmra.mxu0 %v1072
    %v1105 = vpop.f32.mrf.mxu0
    %v1106 = vadd.f32 %v1034, %v1105
    %1107 = vmatmul.f32.gmra.mxu0 %v1074
    %v1108 = vpop.f32.mrf.mxu0
    %v1109 = vadd.f32 %v1037, %v1108
    %1110 = vdwg.mxu0
    %1111 = vmatpush.msra.mxu0 0.0
    %1112 = vmatpush.msra.mxu0 0.0
    %1113 = vmatpush.msra.mxu0 0.0
    %1114 = vmatpush.msra.mxu0 0.0
    %1115 = vmatpush.msra.mxu0 0.0
    %1116 = vmatpush.msra.mxu0 %v1080
    %1117 = vmatpush.msra.mxu0 %v958
    %1118 = vmatpush.msra.mxu0 %v956
    %1119 = vmatpush.msra.mxu0 %v954
    %1120 = vmatpush.msra.mxu0 %v952
    %1121 = vmatpush.msra.mxu0 %v950
    %1122 = vmatpush.msra.mxu0 %v948
    %1123 = vmatpush.msra.mxu0 %v946
    %1124 = vmatpush.msra.mxu0 %v944
    %1125 = vmatpush.msra.mxu0 %v942
    %1126 = vmatpush.msra.mxu0 %v940
    %1127 = vmatmul.f32.gmra.mxu0 %v1068
    %v1128 = vpop.f32.mrf.mxu0
    %v1129 = vadd.f32 %v1057, %v1128
    %1130 = vmatmul.f32.gmra.mxu0 %v1070
    %v1131 = vpop.f32.mrf.mxu0
    %v1132 = vadd.f32 %v1060, %v1131
    %1133 = vmatmul.f32.gmra.mxu0 %v1072
    %v1134 = vpop.f32.mrf.mxu0
    %v1135 = vadd.f32 %v1063, %v1134
    %1136 = vmatmul.f32.gmra.mxu0 %v1074
    %v1137 = vpop.f32.mrf.mxu0
    %v1138 = vadd.f32 %v1066, %v1137
    %1139 = vdwg.mxu0
    %s1140 = scalar_lea.vmem %s5, 352
    %v1141 = vld [vmem:[%s1140] sm:$0xff]
    %v1142 = vld [vmem:[%s1140 + $0x8] sm:$0xff]
    %v1143 = vld [vmem:[%s1140 + $0x10] sm:$0xff]
    %v1144 = vld [vmem:[%s1140 + $0x18] sm:$0xff]
    %v1145 = vld [vmem:[%s1140 + $0x20] sm:$0xff]
    %v1146 = vld [vmem:[%s1140 + $0x28] sm:$0xff]
    %v1147 = vld [vmem:[%s1140 + $0x30] sm:$0xff]
    %v1148 = vld [vmem:[%s1140 + $0x38] sm:$0xff]
    %v1149 = vld [vmem:[%s1140 + $0x40] sm:$0xff]
    %v1150 = vld [vmem:[%s1140 + $0x48] sm:$0xff]
    %v1151 = vld [vmem:[%s1140 + $0x50] sm:$0xff]
    %v1152 = vld [vmem:[%s1140 + $0x58] sm:$0xff]
    %v1153 = vld [vmem:[%s1140 + $0x60] sm:$0xff]
    %v1154 = vld [vmem:[%s1140 + $0x68] sm:$0xff]
    %v1155 = vld [vmem:[%s1140 + $0x70] sm:$0xff]
    %v1156 = vld [vmem:[%s1140 + $0x78] sm:$0xff]
    %v1157 = vld [vmem:[%s1140 + $0x80] sm:$0xff]
    %v1158 = vld [vmem:[%s1140 + $0x88] sm:$0xff]
    %v1159 = vld [vmem:[%s1140 + $0x90] sm:$0xff]
    %v1160 = vld [vmem:[%s1140 + $0x98] sm:$0xff]
    %v1161 = vld [vmem:[%s1140 + $0xa0] sm:$0xf]
    %v1162 = vld [vmem:[%s1140 + $0xa8] sm:$0xf]
    %v1163 = vrot.slane %v928, 2
    %v1164 = vrot.slane %v931, 2
    %v1165 = vsel %vm313, %v1163, %v1164
    %v1166 = vrot.slane %v934, 2
    %v1167 = vsel %vm313, %v1164, %v1166
    %v1168 = vrot.slane %v937, 2
    %v1169 = vsel %vm313, %v1166, %v1168
    %v1170 = vsel %vm995, %v1165, 0
    %v1172 = vsel %vm995, %v1167, 0
    %v1174 = vsel %vm995, %v1169, 0
    %v1176 = vsel %vm995, %v1168, 0
    %v1179 = vsel %vm595, %v1161, 0
    %v1182 = vsel %vm595, %v1162, 0
    %1184 = vmatpush.msra.mxu0 0.0
    %1185 = vmatpush.msra.mxu0 0.0
    %1186 = vmatpush.msra.mxu0 0.0
    %1187 = vmatpush.msra.mxu0 0.0
    %1188 = vmatpush.msra.mxu0 0.0
    %1189 = vmatpush.msra.mxu0 %v1179
    %1190 = vmatpush.msra.mxu0 %v1159
    %1191 = vmatpush.msra.mxu0 %v1157
    %1192 = vmatpush.msra.mxu0 %v1155
    %1193 = vmatpush.msra.mxu0 %v1153
    %1194 = vmatpush.msra.mxu0 %v1151
    %1195 = vmatpush.msra.mxu0 %v1149
    %1196 = vmatpush.msra.mxu0 %v1147
    %1197 = vmatpush.msra.mxu0 %v1145
    %1198 = vmatpush.msra.mxu0 %v1143
    %1199 = vmatpush.msra.mxu0 %v1141
    %1200 = vmatmul.f32.gmra.mxu0 %v1170
    %v1201 = vpop.f32.mrf.mxu0
    %v1202 = vadd.f32 0.0, %v1201
    %1203 = vmatmul.f32.gmra.mxu0 %v1172
    %v1204 = vpop.f32.mrf.mxu0
    %v1205 = vadd.f32 0.0, %v1204
    %1206 = vmatmul.f32.gmra.mxu0 %v1174
    %v1207 = vpop.f32.mrf.mxu0
    %v1208 = vadd.f32 0.0, %v1207
    %1209 = vmatmul.f32.gmra.mxu0 %v1176
    %v1210 = vpop.f32.mrf.mxu0
    %v1211 = vadd.f32 0.0, %v1210
    %1212 = vdwg.mxu0
    %1213 = vmatpush.msra.mxu0 0.0
    %1214 = vmatpush.msra.mxu0 0.0
    %1215 = vmatpush.msra.mxu0 0.0
    %1216 = vmatpush.msra.mxu0 0.0
    %1217 = vmatpush.msra.mxu0 0.0
    %1218 = vmatpush.msra.mxu0 %v1182
    %1219 = vmatpush.msra.mxu0 %v1160
    %1220 = vmatpush.msra.mxu0 %v1158
    %1221 = vmatpush.msra.mxu0 %v1156
    %1222 = vmatpush.msra.mxu0 %v1154
    %1223 = vmatpush.msra.mxu0 %v1152
    %1224 = vmatpush.msra.mxu0 %v1150
    %1225 = vmatpush.msra.mxu0 %v1148
    %1226 = vmatpush.msra.mxu0 %v1146
    %1227 = vmatpush.msra.mxu0 %v1144
    %1228 = vmatpush.msra.mxu0 %v1142
    %1229 = vmatmul.f32.gmra.mxu0 %v1170
    %v1230 = vpop.f32.mrf.mxu0
    %v1231 = vadd.f32 0.0, %v1230
    %1232 = vmatmul.f32.gmra.mxu0 %v1172
    %v1233 = vpop.f32.mrf.mxu0
    %v1234 = vadd.f32 0.0, %v1233
    %1235 = vmatmul.f32.gmra.mxu0 %v1174
    %v1236 = vpop.f32.mrf.mxu0
    %v1237 = vadd.f32 0.0, %v1236
    %1238 = vmatmul.f32.gmra.mxu0 %v1176
    %v1239 = vpop.f32.mrf.mxu0
    %v1240 = vadd.f32 0.0, %v1239
    %1241 = vdwg.mxu0
    %v1242 = vadd.f32 %v1100, %v1202
    %v1243 = vadd.f32 %v1129, %v1231
    %v1244 = vadd.f32 %v1103, %v1205
    %v1245 = vadd.f32 %v1132, %v1234
    %v1246 = vadd.f32 %v1106, %v1208
    %v1247 = vadd.f32 %v1135, %v1237
    %v1248 = vadd.f32 %v1109, %v1211
    %v1249 = vadd.f32 %v1138, %v1240
    %s1250 = scalar_lea.vmem %s5, 528
    %v1251 = vld [vmem:[%s1250] sm:$0xff]
    %v1252 = vld [vmem:[%s1250 + $0x8] sm:$0xff]
    %v1253 = vld [vmem:[%s1250 + $0x10] sm:$0xff]
    %v1254 = vld [vmem:[%s1250 + $0x18] sm:$0xff]
    %v1255 = vld [vmem:[%s1250 + $0x20] sm:$0xff]
    %v1256 = vld [vmem:[%s1250 + $0x28] sm:$0xff]
    %v1257 = vld [vmem:[%s1250 + $0x30] sm:$0xff]
    %v1258 = vld [vmem:[%s1250 + $0x38] sm:$0xff]
    %v1259 = vld [vmem:[%s1250 + $0x40] sm:$0xff]
    %v1260 = vld [vmem:[%s1250 + $0x48] sm:$0xff]
    %v1261 = vld [vmem:[%s1250 + $0x50] sm:$0xff]
    %v1262 = vld [vmem:[%s1250 + $0x58] sm:$0xff]
    %v1263 = vld [vmem:[%s1250 + $0x60] sm:$0xff]
    %v1264 = vld [vmem:[%s1250 + $0x68] sm:$0xff]
    %v1265 = vld [vmem:[%s1250 + $0x70] sm:$0xff]
    %v1266 = vld [vmem:[%s1250 + $0x78] sm:$0xff]
    %v1267 = vld [vmem:[%s1250 + $0x80] sm:$0xff]
    %v1268 = vld [vmem:[%s1250 + $0x88] sm:$0xff]
    %v1269 = vld [vmem:[%s1250 + $0x90] sm:$0xff]
    %v1270 = vld [vmem:[%s1250 + $0x98] sm:$0xff]
    %v1271 = vld [vmem:[%s1250 + $0xa0] sm:$0xf]
    %v1272 = vld [vmem:[%s1250 + $0xa8] sm:$0xf]
    %v1273 = vrot.slane %v928, 3
    %v1274 = vrot.slane %v931, 3
    %v1275 = vsel %vm454, %v1273, %v1274
    %v1276 = vrot.slane %v934, 3
    %v1277 = vsel %vm454, %v1274, %v1276
    %v1278 = vrot.slane %v937, 3
    %v1279 = vsel %vm454, %v1276, %v1278
    %v1280 = vsel %vm995, %v1275, 0
    %v1282 = vsel %vm995, %v1277, 0
    %v1284 = vsel %vm995, %v1279, 0
    %v1286 = vsel %vm995, %v1278, 0
    %v1289 = vsel %vm595, %v1271, 0
    %v1292 = vsel %vm595, %v1272, 0
    %1294 = vmatpush.msra.mxu0 0.0
    %1295 = vmatpush.msra.mxu0 0.0
    %1296 = vmatpush.msra.mxu0 0.0
    %1297 = vmatpush.msra.mxu0 0.0
    %1298 = vmatpush.msra.mxu0 0.0
    %1299 = vmatpush.msra.mxu0 %v1289
    %1300 = vmatpush.msra.mxu0 %v1269
    %1301 = vmatpush.msra.mxu0 %v1267
    %1302 = vmatpush.msra.mxu0 %v1265
    %1303 = vmatpush.msra.mxu0 %v1263
    %1304 = vmatpush.msra.mxu0 %v1261
    %1305 = vmatpush.msra.mxu0 %v1259
    %1306 = vmatpush.msra.mxu0 %v1257
    %1307 = vmatpush.msra.mxu0 %v1255
    %1308 = vmatpush.msra.mxu0 %v1253
    %1309 = vmatpush.msra.mxu0 %v1251
    %1310 = vmatmul.f32.gmra.mxu0 %v1280
    %v1311 = vpop.f32.mrf.mxu0
    %v1312 = vadd.f32 0.0, %v1311
    %1313 = vmatmul.f32.gmra.mxu0 %v1282
    %v1314 = vpop.f32.mrf.mxu0
    %v1315 = vadd.f32 0.0, %v1314
    %1316 = vmatmul.f32.gmra.mxu0 %v1284
    %v1317 = vpop.f32.mrf.mxu0
    %v1318 = vadd.f32 0.0, %v1317
    %1319 = vmatmul.f32.gmra.mxu0 %v1286
    %v1320 = vpop.f32.mrf.mxu0
    %v1321 = vadd.f32 0.0, %v1320
    %1322 = vdwg.mxu0
    %1323 = vmatpush.msra.mxu0 0.0
    %1324 = vmatpush.msra.mxu0 0.0
    %1325 = vmatpush.msra.mxu0 0.0
    %1326 = vmatpush.msra.mxu0 0.0
    %1327 = vmatpush.msra.mxu0 0.0
    %1328 = vmatpush.msra.mxu0 %v1292
    %1329 = vmatpush.msra.mxu0 %v1270
    %1330 = vmatpush.msra.mxu0 %v1268
    %1331 = vmatpush.msra.mxu0 %v1266
    %1332 = vmatpush.msra.mxu0 %v1264
    %1333 = vmatpush.msra.mxu0 %v1262
    %1334 = vmatpush.msra.mxu0 %v1260
    %1335 = vmatpush.msra.mxu0 %v1258
    %1336 = vmatpush.msra.mxu0 %v1256
    %1337 = vmatpush.msra.mxu0 %v1254
    %1338 = vmatpush.msra.mxu0 %v1252
    %1339 = vmatmul.f32.gmra.mxu0 %v1280
    %v1340 = vpop.f32.mrf.mxu0
    %v1341 = vadd.f32 0.0, %v1340
    %1342 = vmatmul.f32.gmra.mxu0 %v1282
    %v1343 = vpop.f32.mrf.mxu0
    %v1344 = vadd.f32 0.0, %v1343
    %1345 = vmatmul.f32.gmra.mxu0 %v1284
    %v1346 = vpop.f32.mrf.mxu0
    %v1347 = vadd.f32 0.0, %v1346
    %1348 = vmatmul.f32.gmra.mxu0 %v1286
    %v1349 = vpop.f32.mrf.mxu0
    %v1350 = vadd.f32 0.0, %v1349
    %1351 = vdwg.mxu0
    %v1352 = vadd.f32 %v1242, %v1312
    %v1353 = vadd.f32 %v1243, %v1341
    %v1354 = vadd.f32 %v1244, %v1315
    %v1355 = vadd.f32 %v1245, %v1344
    %v1356 = vadd.f32 %v1246, %v1318
    %v1357 = vadd.f32 %v1247, %v1347
    %v1358 = vadd.f32 %v1248, %v1321
    %v1359 = vadd.f32 %v1249, %v1350
    %s1360 = scalar_lea.vmem %s5, 704
    %v1361 = vld [vmem:[%s1360] sm:$0xff]
    %v1362 = vld [vmem:[%s1360 + $0x8] sm:$0xff]
    %v1363 = vld [vmem:[%s1360 + $0x10] sm:$0xff]
    %v1364 = vld [vmem:[%s1360 + $0x18] sm:$0xff]
    %v1365 = vld [vmem:[%s1360 + $0x20] sm:$0xff]
    %v1366 = vld [vmem:[%s1360 + $0x28] sm:$0xff]
    %v1367 = vld [vmem:[%s1360 + $0x30] sm:$0xff]
    %v1368 = vld [vmem:[%s1360 + $0x38] sm:$0xff]
    %v1369 = vld [vmem:[%s1360 + $0x40] sm:$0xff]
    %v1370 = vld [vmem:[%s1360 + $0x48] sm:$0xff]
    %v1371 = vld [vmem:[%s1360 + $0x50] sm:$0xff]
    %v1372 = vld [vmem:[%s1360 + $0x58] sm:$0xff]
    %v1373 = vld [vmem:[%s1360 + $0x60] sm:$0xff]
    %v1374 = vld [vmem:[%s1360 + $0x68] sm:$0xff]
    %v1375 = vld [vmem:[%s1360 + $0x70] sm:$0xff]
    %v1376 = vld [vmem:[%s1360 + $0x78] sm:$0xff]
    %v1377 = vld [vmem:[%s1360 + $0x80] sm:$0xff]
    %v1378 = vld [vmem:[%s1360 + $0x88] sm:$0xff]
    %v1379 = vld [vmem:[%s1360 + $0x90] sm:$0xff]
    %v1380 = vld [vmem:[%s1360 + $0x98] sm:$0xff]
    %v1381 = vld [vmem:[%s1360 + $0xa0] sm:$0xf]
    %v1382 = vld [vmem:[%s1360 + $0xa8] sm:$0xf]
    %v1383 = vrot.slane %v928, 4
    %v1384 = vrot.slane %v931, 4
    %v1385 = vsel %vm595, %v1383, %v1384
    %v1386 = vrot.slane %v934, 4
    %v1387 = vsel %vm595, %v1384, %v1386
    %v1388 = vrot.slane %v937, 4
    %v1389 = vsel %vm595, %v1386, %v1388
    %v1390 = vsel %vm995, %v1385, 0
    %v1392 = vsel %vm995, %v1387, 0
    %v1394 = vsel %vm995, %v1389, 0
    %v1396 = vsel %vm995, %v1388, 0
    %v1399 = vsel %vm595, %v1381, 0
    %v1402 = vsel %vm595, %v1382, 0
    %1404 = vmatpush.msra.mxu0 0.0
    %1405 = vmatpush.msra.mxu0 0.0
    %1406 = vmatpush.msra.mxu0 0.0
    %1407 = vmatpush.msra.mxu0 0.0
    %1408 = vmatpush.msra.mxu0 0.0
    %1409 = vmatpush.msra.mxu0 %v1399
    %1410 = vmatpush.msra.mxu0 %v1379
    %1411 = vmatpush.msra.mxu0 %v1377
    %1412 = vmatpush.msra.mxu0 %v1375
    %1413 = vmatpush.msra.mxu0 %v1373
    %1414 = vmatpush.msra.mxu0 %v1371
    %1415 = vmatpush.msra.mxu0 %v1369
    %1416 = vmatpush.msra.mxu0 %v1367
    %1417 = vmatpush.msra.mxu0 %v1365
    %1418 = vmatpush.msra.mxu0 %v1363
    %1419 = vmatpush.msra.mxu0 %v1361
    %1420 = vmatmul.f32.gmra.mxu0 %v1390
    %v1421 = vpop.f32.mrf.mxu0
    %v1422 = vadd.f32 0.0, %v1421
    %1423 = vmatmul.f32.gmra.mxu0 %v1392
    %v1424 = vpop.f32.mrf.mxu0
    %v1425 = vadd.f32 0.0, %v1424
    %1426 = vmatmul.f32.gmra.mxu0 %v1394
    %v1427 = vpop.f32.mrf.mxu0
    %v1428 = vadd.f32 0.0, %v1427
    %1429 = vmatmul.f32.gmra.mxu0 %v1396
    %v1430 = vpop.f32.mrf.mxu0
    %v1431 = vadd.f32 0.0, %v1430
    %1432 = vdwg.mxu0
    %1433 = vmatpush.msra.mxu0 0.0
    %1434 = vmatpush.msra.mxu0 0.0
    %1435 = vmatpush.msra.mxu0 0.0
    %1436 = vmatpush.msra.mxu0 0.0
    %1437 = vmatpush.msra.mxu0 0.0
    %1438 = vmatpush.msra.mxu0 %v1402
    %1439 = vmatpush.msra.mxu0 %v1380
    %1440 = vmatpush.msra.mxu0 %v1378
    %1441 = vmatpush.msra.mxu0 %v1376
    %1442 = vmatpush.msra.mxu0 %v1374
    %1443 = vmatpush.msra.mxu0 %v1372
    %1444 = vmatpush.msra.mxu0 %v1370
    %1445 = vmatpush.msra.mxu0 %v1368
    %1446 = vmatpush.msra.mxu0 %v1366
    %1447 = vmatpush.msra.mxu0 %v1364
    %1448 = vmatpush.msra.mxu0 %v1362
    %1449 = vmatmul.f32.gmra.mxu0 %v1390
    %v1450 = vpop.f32.mrf.mxu0
    %v1451 = vadd.f32 0.0, %v1450
    %1452 = vmatmul.f32.gmra.mxu0 %v1392
    %v1453 = vpop.f32.mrf.mxu0
    %v1454 = vadd.f32 0.0, %v1453
    %1455 = vmatmul.f32.gmra.mxu0 %v1394
    %v1456 = vpop.f32.mrf.mxu0
    %v1457 = vadd.f32 0.0, %v1456
    %1458 = vmatmul.f32.gmra.mxu0 %v1396
    %v1459 = vpop.f32.mrf.mxu0
    %v1460 = vadd.f32 0.0, %v1459
    %1461 = vdwg.mxu0
    %v1462 = vadd.f32 %v1352, %v1422
    %v1463 = vadd.f32 %v1353, %v1451
    %v1464 = vadd.f32 %v1354, %v1425
    %v1465 = vadd.f32 %v1355, %v1454
    %v1466 = vadd.f32 %v1356, %v1428
    %v1467 = vadd.f32 %v1357, %v1457
    %v1468 = vadd.f32 %v1358, %v1431
    %v1469 = vadd.f32 %v1359, %v1460
    %v1470 = vld [vmem:[%s6] sm:$0x3]
    %v1472 = vperm.slane %v1470, 0
    %v1473 = vperm.slane %v1470, 1
    %v1476 = vadd.f32 %v1462, %v1472
    %v1477 = vadd.f32 %v1463, %v1473
    %v1478 = vadd.f32 %v1464, %v1472
    %v1479 = vadd.f32 %v1465, %v1473
    %v1480 = vadd.f32 %v1466, %v1472
    %v1481 = vadd.f32 %v1467, %v1473
    %v1482 = vadd.f32 %v1468, %v1472
    %v1483 = vadd.f32 %v1469, %v1473
    %v1484 = vtanh.pop %v1476
    %v1485 = vtanh.pop %v1477
    %v1486 = vtanh.pop %v1478
    %v1487 = vtanh.pop %v1479
    %v1488 = vtanh.pop %v1480
    %v1489 = vtanh.pop %v1481
    %v1490 = vtanh.pop %v1482
    %v1491 = vtanh.pop %v1483
    %v1492 = vld [vmem:[%s8] sm:$0xff]
    %v1493 = vld [vmem:[%s8 + $0x8] sm:$0x3f]
    %v1494 = vld [vmem:[%s7] sm:$0xff]
    %v1495 = vld [vmem:[%s7 + $0x8] sm:$0xff]
    %v1496 = vld [vmem:[%s7 + $0x10] sm:$0xff]
    %v1497 = vld [vmem:[%s7 + $0x18] sm:$0xff]
    %v1498 = vld [vmem:[%s7 + $0x20] sm:$0xff]
    %v1499 = vld [vmem:[%s7 + $0x28] sm:$0xff]
    %v1500 = vld [vmem:[%s7 + $0x30] sm:$0xff]
    %v1501 = vld [vmem:[%s7 + $0x38] sm:$0xff]
    %v1502 = vld [vmem:[%s7 + $0x40] sm:$0xff]
    %v1503 = vld [vmem:[%s7 + $0x48] sm:$0xff]
    %v1504 = vld [vmem:[%s7 + $0x50] sm:$0xff]
    %v1505 = vld [vmem:[%s7 + $0x58] sm:$0xff]
    %v1506 = vld [vmem:[%s7 + $0x60] sm:$0xff]
    %v1507 = vld [vmem:[%s7 + $0x68] sm:$0xff]
    %v1508 = vld [vmem:[%s7 + $0x70] sm:$0xff]
    %v1509 = vld [vmem:[%s7 + $0x78] sm:$0xff]
    %v1510 = vld [vmem:[%s7 + $0x80] sm:$0xff]
    %v1511 = vld [vmem:[%s7 + $0x88] sm:$0xff]
    %v1512 = vld [vmem:[%s7 + $0x90] sm:$0xff]
    %v1513 = vld [vmem:[%s7 + $0x98] sm:$0xff]
    %v1515 = vsel %vm107, %v1485, 0
    %v1518 = vsel %vm107, %v1487, 0
    %v1521 = vsel %vm107, %v1489, 0
    %v1524 = vsel %vm107, %v1491, 0
    %1526 = vmatpush.msra.mxu0 %v1509
    %1527 = vmatpush.msra.mxu0 %v1508
    %1528 = vmatpush.msra.mxu0 %v1507
    %1529 = vmatpush.msra.mxu0 %v1506
    %1530 = vmatpush.msra.mxu0 %v1505
    %1531 = vmatpush.msra.mxu0 %v1504
    %1532 = vmatpush.msra.mxu0 %v1503
    %1533 = vmatpush.msra.mxu0 %v1502
    %1534 = vmatpush.msra.mxu0 %v1501
    %1535 = vmatpush.msra.mxu0 %v1500
    %1536 = vmatpush.msra.mxu0 %v1499
    %1537 = vmatpush.msra.mxu0 %v1498
    %1538 = vmatpush.msra.mxu0 %v1497
    %1539 = vmatpush.msra.mxu0 %v1496
    %1540 = vmatpush.msra.mxu0 %v1495
    %1541 = vmatpush.msra.mxu0 %v1494
    %1542 = vmatmul.f32.gmra.mxu0 %v1484
    %v1543 = vpop.f32.mrf.mxu0
    %v1544 = vadd.f32 0.0, %v1543
    %1545 = vmatmul.f32.gmra.mxu0 %v1486
    %v1546 = vpop.f32.mrf.mxu0
    %v1547 = vadd.f32 0.0, %v1546
    %1548 = vmatmul.f32.gmra.mxu0 %v1488
    %v1549 = vpop.f32.mrf.mxu0
    %v1550 = vadd.f32 0.0, %v1549
    %1551 = vmatmul.f32.gmra.mxu0 %v1490
    %v1552 = vpop.f32.mrf.mxu0
    %v1553 = vadd.f32 0.0, %v1552
    %1554 = vdwg.mxu0
    %1555 = vmatpush.msra.mxu0 0.0
    %1556 = vmatpush.msra.mxu0 0.0
    %1557 = vmatpush.msra.mxu0 0.0
    %1558 = vmatpush.msra.mxu0 0.0
    %1559 = vmatpush.msra.mxu0 0.0
    %1560 = vmatpush.msra.mxu0 0.0
    %1561 = vmatpush.msra.mxu0 0.0
    %1562 = vmatpush.msra.mxu0 0.0
    %1563 = vmatpush.msra.mxu0 0.0
    %1564 = vmatpush.msra.mxu0 0.0
    %1565 = vmatpush.msra.mxu0 0.0
    %1566 = vmatpush.msra.mxu0 0.0
    %1567 = vmatpush.msra.mxu0 %v1513
    %1568 = vmatpush.msra.mxu0 %v1512
    %1569 = vmatpush.msra.mxu0 %v1511
    %1570 = vmatpush.msra.mxu0 %v1510
    %1571 = vmatmul.f32.gmra.mxu0 %v1515
    %v1572 = vpop.f32.mrf.mxu0
    %v1573 = vadd.f32 %v1544, %v1572
    %1574 = vmatmul.f32.gmra.mxu0 %v1518
    %v1575 = vpop.f32.mrf.mxu0
    %v1576 = vadd.f32 %v1547, %v1575
    %1577 = vmatmul.f32.gmra.mxu0 %v1521
    %v1578 = vpop.f32.mrf.mxu0
    %v1579 = vadd.f32 %v1550, %v1578
    %1580 = vmatmul.f32.gmra.mxu0 %v1524
    %v1581 = vpop.f32.mrf.mxu0
    %v1582 = vadd.f32 %v1553, %v1581
    %1583 = vdwg.mxu0
    %vm1584 = vcmask 228352
    %v1586 = vsel %vm1584, %v1492, 0
    %v1589 = vsel %vm1584, %v1493, 0
    %v1592 = vsel %vm595, %v1582, 0
    %1594 = vmatpush.msra.mxu0 0.0
    %1595 = vmatpush.msra.mxu0 0.0
    %1596 = vmatpush.msra.mxu0 0.0
    %1597 = vmatpush.msra.mxu0 0.0
    %1598 = vmatpush.msra.mxu0 0.0
    %1599 = vmatpush.msra.mxu0 0.0
    %1600 = vmatpush.msra.mxu0 0.0
    %1601 = vmatpush.msra.mxu0 0.0
    %1602 = vmatpush.msra.mxu0 0.0
    %1603 = vmatpush.msra.mxu0 0.0
    %1604 = vmatpush.msra.mxu0 0.0
    %1605 = vmatpush.msra.mxu0 0.0
    %1606 = vmatpush.msra.mxu0 %v1592
    %1607 = vmatpush.msra.mxu0 %v1579
    %1608 = vmatpush.msra.mxu0 %v1576
    %1609 = vmatpush.msra.mxu0 %v1573
    %1610 = vmatmul.f32.gmra.mxu0 %v1586
    %v1611 = vpop.f32.mrf.mxu0
    %v1612 = vadd.f32 0.0, %v1611
    %1613 = vmatmul.f32.gmra.mxu0 %v1589
    %v1614 = vpop.f32.mrf.mxu0
    %v1615 = vadd.f32 0.0, %v1614
    %1616 = vdwg.mxu0
    %v1617 = vld [vmem:[%s9] sm:$0xff]
    %v1618 = vld [vmem:[%s9 + $0x8] sm:$0xff]
    %v1619 = vld [vmem:[%s9 + $0x10] sm:$0xff]
    %v1620 = vld [vmem:[%s9 + $0x18] sm:$0xff]
    %v1621 = vld [vmem:[%s9 + $0x20] sm:$0xff]
    %v1622 = vld [vmem:[%s9 + $0x28] sm:$0xff]
    %v1623 = vld [vmem:[%s9 + $0x30] sm:$0xff]
    %v1624 = vld [vmem:[%s9 + $0x38] sm:$0xff]
    %v1625 = vld [vmem:[%s9 + $0x40] sm:$0xff]
    %v1626 = vld [vmem:[%s9 + $0x48] sm:$0xff]
    %s1627 = scalar_lea.vmem %s9, 80
    %v1628 = vld [vmem:[%s1627] sm:$0xff]
    %v1629 = vld [vmem:[%s1627 + $0x8] sm:$0xff]
    %v1630 = vld [vmem:[%s1627 + $0x10] sm:$0xff]
    %v1631 = vld [vmem:[%s1627 + $0x18] sm:$0xff]
    %v1632 = vld [vmem:[%s1627 + $0x20] sm:$0xff]
    %v1633 = vld [vmem:[%s1627 + $0x28] sm:$0xff]
    %v1634 = vld [vmem:[%s1627 + $0x30] sm:$0xff]
    %v1635 = vld [vmem:[%s1627 + $0x38] sm:$0xff]
    %v1636 = vld [vmem:[%s1627 + $0x40] sm:$0xff]
    %v1637 = vld [vmem:[%s1627 + $0x48] sm:$0xff]
    %v1640 = vrot.slane %v1612, 1
    %v1641 = vrot.slane %v1615, 1
    %v1642 = vsel %vm89, %v1640, %v1641
    %vm1643 = vcmask 654336
    %v1644 = vsel %vm1643, %v1642, 0
    %v1646 = vsel %vm1643, %v1641, 0
    %1648 = vmatpush.msra.mxu0 0.0
    %1649 = vmatpush.msra.mxu0 0.0
    %1650 = vmatpush.msra.mxu0 0.0
    %1651 = vmatpush.msra.mxu0 0.0
    %1652 = vmatpush.msra.mxu0 0.0
    %1653 = vmatpush.msra.mxu0 0.0
    %1654 = vmatpush.msra.mxu0 %v1637
    %1655 = vmatpush.msra.mxu0 %v1636
    %1656 = vmatpush.msra.mxu0 %v1635
    %1657 = vmatpush.msra.mxu0 %v1634
    %1658 = vmatpush.msra.mxu0 %v1633
    %1659 = vmatpush.msra.mxu0 %v1632
    %1660 = vmatpush.msra.mxu0 %v1631
    %1661 = vmatpush.msra.mxu0 %v1630
    %1662 = vmatpush.msra.mxu0 %v1629
    %1663 = vmatpush.msra.mxu0 %v1628
    %1664 = vmatmul.f32.gmra.mxu0 %v1644
    %v1665 = vpop.f32.mrf.mxu0
    %v1666 = vadd.f32 0.0, %v1665
    %1667 = vmatmul.f32.gmra.mxu0 %v1646
    %v1668 = vpop.f32.mrf.mxu0
    %1669 = vdwg.mxu0
    %v1670 = vsel %vm1643, %v1612, 0
    %v1672 = vsel %vm1643, %v1615, 0
    %1674 = vmatpush.msra.mxu0 0.0
    %1675 = vmatpush.msra.mxu0 0.0
    %1676 = vmatpush.msra.mxu0 0.0
    %1677 = vmatpush.msra.mxu0 0.0
    %1678 = vmatpush.msra.mxu0 0.0
    %1679 = vmatpush.msra.mxu0 0.0
    %1680 = vmatpush.msra.mxu0 %v1626
    %1681 = vmatpush.msra.mxu0 %v1625
    %1682 = vmatpush.msra.mxu0 %v1624
    %1683 = vmatpush.msra.mxu0 %v1623
    %1684 = vmatpush.msra.mxu0 %v1622
    %1685 = vmatpush.msra.mxu0 %v1621
    %1686 = vmatpush.msra.mxu0 %v1620
    %1687 = vmatpush.msra.mxu0 %v1619
    %1688 = vmatpush.msra.mxu0 %v1618
    %1689 = vmatpush.msra.mxu0 %v1617
    %1690 = vmatmul.f32.gmra.mxu0 %v1670
    %v1691 = vpop.f32.mrf.mxu0
    %v1692 = vadd.f32 %v1666, %v1691
    %1693 = vmatmul.f32.gmra.mxu0 %v1672
    %v1694 = vpop.f32.mrf.mxu0
    %1695 = vdwg.mxu0
    %s1696 = scalar_lea.vmem %s9, 160
    %v1697 = vld [vmem:[%s1696] sm:$0xff]
    %v1698 = vld [vmem:[%s1696 + $0x8] sm:$0xff]
    %v1699 = vld [vmem:[%s1696 + $0x10] sm:$0xff]
    %v1700 = vld [vmem:[%s1696 + $0x18] sm:$0xff]
    %v1701 = vld [vmem:[%s1696 + $0x20] sm:$0xff]
    %v1702 = vld [vmem:[%s1696 + $0x28] sm:$0xff]
    %v1703 = vld [vmem:[%s1696 + $0x30] sm:$0xff]
    %v1704 = vld [vmem:[%s1696 + $0x38] sm:$0xff]
    %v1705 = vld [vmem:[%s1696 + $0x40] sm:$0xff]
    %v1706 = vld [vmem:[%s1696 + $0x48] sm:$0xff]
    %v1707 = vrot.slane %v1612, 2
    %v1708 = vrot.slane %v1615, 2
    %v1709 = vsel %vm313, %v1707, %v1708
    %v1710 = vsel %vm1643, %v1709, 0
    %v1712 = vsel %vm1643, %v1708, 0
    %1714 = vmatpush.msra.mxu0 0.0
    %1715 = vmatpush.msra.mxu0 0.0
    %1716 = vmatpush.msra.mxu0 0.0
    %1717 = vmatpush.msra.mxu0 0.0
    %1718 = vmatpush.msra.mxu0 0.0
    %1719 = vmatpush.msra.mxu0 0.0
    %1720 = vmatpush.msra.mxu0 %v1706
    %1721 = vmatpush.msra.mxu0 %v1705
    %1722 = vmatpush.msra.mxu0 %v1704
    %1723 = vmatpush.msra.mxu0 %v1703
    %1724 = vmatpush.msra.mxu0 %v1702
    %1725 = vmatpush.msra.mxu0 %v1701
    %1726 = vmatpush.msra.mxu0 %v1700
    %1727 = vmatpush.msra.mxu0 %v1699
    %1728 = vmatpush.msra.mxu0 %v1698
    %1729 = vmatpush.msra.mxu0 %v1697
    %1730 = vmatmul.f32.gmra.mxu0 %v1710
    %v1731 = vpop.f32.mrf.mxu0
    %v1732 = vadd.f32 0.0, %v1731
    %1733 = vmatmul.f32.gmra.mxu0 %v1712
    %v1734 = vpop.f32.mrf.mxu0
    %1735 = vdwg.mxu0
    %v1736 = vadd.f32 %v1692, %v1732
    %s1737 = scalar_lea.vmem %s9, 240
    %v1738 = vld [vmem:[%s1737] sm:$0xff]
    %v1739 = vld [vmem:[%s1737 + $0x8] sm:$0xff]
    %v1740 = vld [vmem:[%s1737 + $0x10] sm:$0xff]
    %v1741 = vld [vmem:[%s1737 + $0x18] sm:$0xff]
    %v1742 = vld [vmem:[%s1737 + $0x20] sm:$0xff]
    %v1743 = vld [vmem:[%s1737 + $0x28] sm:$0xff]
    %v1744 = vld [vmem:[%s1737 + $0x30] sm:$0xff]
    %v1745 = vld [vmem:[%s1737 + $0x38] sm:$0xff]
    %v1746 = vld [vmem:[%s1737 + $0x40] sm:$0xff]
    %v1747 = vld [vmem:[%s1737 + $0x48] sm:$0xff]
    %v1748 = vrot.slane %v1612, 3
    %v1749 = vrot.slane %v1615, 3
    %v1750 = vsel %vm454, %v1748, %v1749
    %v1751 = vsel %vm1643, %v1750, 0
    %v1753 = vsel %vm1643, %v1749, 0
    %1755 = vmatpush.msra.mxu0 0.0
    %1756 = vmatpush.msra.mxu0 0.0
    %1757 = vmatpush.msra.mxu0 0.0
    %1758 = vmatpush.msra.mxu0 0.0
    %1759 = vmatpush.msra.mxu0 0.0
    %1760 = vmatpush.msra.mxu0 0.0
    %1761 = vmatpush.msra.mxu0 %v1747
    %1762 = vmatpush.msra.mxu0 %v1746
    %1763 = vmatpush.msra.mxu0 %v1745
    %1764 = vmatpush.msra.mxu0 %v1744
    %1765 = vmatpush.msra.mxu0 %v1743
    %1766 = vmatpush.msra.mxu0 %v1742
    %1767 = vmatpush.msra.mxu0 %v1741
    %1768 = vmatpush.msra.mxu0 %v1740
    %1769 = vmatpush.msra.mxu0 %v1739
    %1770 = vmatpush.msra.mxu0 %v1738
    %1771 = vmatmul.f32.gmra.mxu0 %v1751
    %v1772 = vpop.f32.mrf.mxu0
    %v1773 = vadd.f32 0.0, %v1772
    %1774 = vmatmul.f32.gmra.mxu0 %v1753
    %v1775 = vpop.f32.mrf.mxu0
    %1776 = vdwg.mxu0
    %v1777 = vadd.f32 %v1736, %v1773
    %s1778 = scalar_lea.vmem %s9, 320
    %v1779 = vld [vmem:[%s1778] sm:$0xff]
    %v1780 = vld [vmem:[%s1778 + $0x8] sm:$0xff]
    %v1781 = vld [vmem:[%s1778 + $0x10] sm:$0xff]
    %v1782 = vld [vmem:[%s1778 + $0x18] sm:$0xff]
    %v1783 = vld [vmem:[%s1778 + $0x20] sm:$0xff]
    %v1784 = vld [vmem:[%s1778 + $0x28] sm:$0xff]
    %v1785 = vld [vmem:[%s1778 + $0x30] sm:$0xff]
    %v1786 = vld [vmem:[%s1778 + $0x38] sm:$0xff]
    %v1787 = vld [vmem:[%s1778 + $0x40] sm:$0xff]
    %v1788 = vld [vmem:[%s1778 + $0x48] sm:$0xff]
    %v1789 = vrot.slane %v1612, 4
    %v1790 = vrot.slane %v1615, 4
    %v1791 = vsel %vm595, %v1789, %v1790
    %v1792 = vsel %vm1643, %v1791, 0
    %v1794 = vsel %vm1643, %v1790, 0
    %1796 = vmatpush.msra.mxu0 0.0
    %1797 = vmatpush.msra.mxu0 0.0
    %1798 = vmatpush.msra.mxu0 0.0
    %1799 = vmatpush.msra.mxu0 0.0
    %1800 = vmatpush.msra.mxu0 0.0
    %1801 = vmatpush.msra.mxu0 0.0
    %1802 = vmatpush.msra.mxu0 %v1788
    %1803 = vmatpush.msra.mxu0 %v1787
    %1804 = vmatpush.msra.mxu0 %v1786
    %1805 = vmatpush.msra.mxu0 %v1785
    %1806 = vmatpush.msra.mxu0 %v1784
    %1807 = vmatpush.msra.mxu0 %v1783
    %1808 = vmatpush.msra.mxu0 %v1782
    %1809 = vmatpush.msra.mxu0 %v1781
    %1810 = vmatpush.msra.mxu0 %v1780
    %1811 = vmatpush.msra.mxu0 %v1779
    %1812 = vmatmul.f32.gmra.mxu0 %v1792
    %v1813 = vpop.f32.mrf.mxu0
    %v1814 = vadd.f32 0.0, %v1813
    %1815 = vmatmul.f32.gmra.mxu0 %v1794
    %v1816 = vpop.f32.mrf.mxu0
    %1817 = vdwg.mxu0
    %v1818 = vadd.f32 %v1777, %v1814
    %v1820 = vrot.slane %v1818, 4
    %vm1822 = vcmask 1040384
    %v1823 = vsel %vm1822, %v1818, %v1820
    %v1824 = vld [vmem:[%s10] sm:$0x1]
    %v1826 = vperm.slane %v1824, 0
    %v1828 = vadd.f32 %v1823, %v1826
    %v1829 = vtanh.pop %v1828
    %v1830 = vld [vmem:[%s11] sm:$0xff]
    %v1831 = vld [vmem:[%s11 + $0x8] sm:$0xff]
    %v1832 = vld [vmem:[%s11 + $0x10] sm:$0xff]
    %v1833 = vld [vmem:[%s11 + $0x18] sm:$0xff]
    %v1834 = vld [vmem:[%s11 + $0x20] sm:$0xff]
    %v1835 = vld [vmem:[%s11 + $0x28] sm:$0xff]
    %v1836 = vld [vmem:[%s11 + $0x30] sm:$0xff]
    %v1837 = vld [vmem:[%s11 + $0x38] sm:$0xff]
    %v1838 = vld [vmem:[%s11 + $0x40] sm:$0xff]
    %v1839 = vld [vmem:[%s11 + $0x48] sm:$0xff]
    %v1840 = vld [vmem:[%s11 + $0x50] sm:$0xff]
    %v1841 = vld [vmem:[%s11 + $0x58] sm:$0xff]
    %v1842 = vld [vmem:[%s11 + $0x60] sm:$0xff]
    %v1843 = vld [vmem:[%s11 + $0x68] sm:$0xff]
    %v1844 = vld [vmem:[%s11 + $0x70] sm:$0xff]
    %v1845 = vld [vmem:[%s12] sm:$0x1]
    %v1847 = vperm.slane %v1845, 0
    %vm1849 = vcmask 982016
    %v1851 = vsel %vm1849, %v1829, 0
    %1853 = vmatpush.msra.mxu0 0.0
    %1854 = vmatpush.msra.mxu0 %v1844
    %1855 = vmatpush.msra.mxu0 %v1843
    %1856 = vmatpush.msra.mxu0 %v1842
    %1857 = vmatpush.msra.mxu0 %v1841
    %1858 = vmatpush.msra.mxu0 %v1840
    %1859 = vmatpush.msra.mxu0 %v1839
    %1860 = vmatpush.msra.mxu0 %v1838
    %1861 = vmatpush.msra.mxu0 %v1837
    %1862 = vmatpush.msra.mxu0 %v1836
    %1863 = vmatpush.msra.mxu0 %v1835
    %1864 = vmatpush.msra.mxu0 %v1834
    %1865 = vmatpush.msra.mxu0 %v1833
    %1866 = vmatpush.msra.mxu0 %v1832
    %1867 = vmatpush.msra.mxu0 %v1831
    %1868 = vmatpush.msra.mxu0 %v1830
    %1869 = vmatmul.f32.gmra.mxu0 %v1851
    %v1870 = vpop.f32.mrf.mxu0
    %v1871 = vadd.f32 %v1847, %v1870
    %1872 = vdwg.mxu0
    %v1873 = vtanh.pop %v1871
    %1874 = vst [vmem:[#allocation2] sm:$0x3] %v1873
    %v1875 = vld [vmem:[%s13] sm:$0xff]
    %v1876 = vld [vmem:[%s13 + $0x8] sm:$0xff]
    %v1877 = vld [vmem:[%s13 + $0x10] sm:$0xff]
    %v1878 = vld [vmem:[%s13 + $0x18] sm:$0xff]
    %v1879 = vld [vmem:[%s13 + $0x20] sm:$0xff]
    %v1880 = vld [vmem:[%s13 + $0x28] sm:$0xff]
    %v1881 = vld [vmem:[%s13 + $0x30] sm:$0xff]
    %v1882 = vld [vmem:[%s13 + $0x38] sm:$0xff]
    %v1883 = vld [vmem:[%s13 + $0x40] sm:$0xff]
    %v1884 = vld [vmem:[%s13 + $0x48] sm:$0xff]
    %v1885 = vld [vmem:[%s13 + $0x50] sm:$0xff]
    %v1886 = vld [vmem:[%s13 + $0x58] sm:$0xff]
    %v1887 = vld [vmem:[%s13 + $0x60] sm:$0xff]
    %v1888 = vld [vmem:[%s13 + $0x68] sm:$0xff]
    %v1889 = vld [vmem:[%s13 + $0x70] sm:$0xff]
    %v1890 = vld [vmem:[%s13 + $0x78] sm:$0xff]
    %v1891 = vld [vmem:[%s14] sm:$0x1]
    %v1893 = vperm.slane %v1891, 0
    %1895 = vmatpush.msra.mxu0 %v1890
    %1896 = vmatpush.msra.mxu0 %v1889
    %1897 = vmatpush.msra.mxu0 %v1888
    %1898 = vmatpush.msra.mxu0 %v1887
    %1899 = vmatpush.msra.mxu0 %v1886
    %1900 = vmatpush.msra.mxu0 %v1885
    %1901 = vmatpush.msra.mxu0 %v1884
    %1902 = vmatpush.msra.mxu0 %v1883
    %1903 = vmatpush.msra.mxu0 %v1882
    %1904 = vmatpush.msra.mxu0 %v1881
    %1905 = vmatpush.msra.mxu0 %v1880
    %1906 = vmatpush.msra.mxu0 %v1879
    %1907 = vmatpush.msra.mxu0 %v1878
    %1908 = vmatpush.msra.mxu0 %v1877
    %1909 = vmatpush.msra.mxu0 %v1876
    %1910 = vmatpush.msra.mxu0 %v1875
    %1911 = vmatmul.f32.gmra.mxu0 %v1873
    %v1912 = vpop.f32.mrf.mxu0
    %v1913 = vadd.f32 %v1893, %v1912
    %1914 = vdwg.mxu0
    %v1915 = vlaneseq
    %v1916 = vand.u32 %v1915, 127
    %vm1917 = vcmp.lt.s32.totalorder %v1916, 10
    %v1918 = vsel %vm1917, %v1913, -1e+30
    %vm1919 = vcmask 1041408
    %v1920 = vsel %vm1919, %v1918, -inf
    %1921 = vmax.xlane.f32.xlu0 %v1920
    %v1922 = vpop.xlane.xlu0 %1921
    %v1923 = vsub.f32 %v1918, %v1922
    %v1924 = vmul.f32 %v1923, 1.442695
    %v1925 = vpow.pop %v1924
    %v1926 = vsel %vm1919, %v1925, 0.0
    %1927 = vadd.xlane.f32.xlu0 %v1926
    %v1928 = vpop.xlane.xlu0 %1927
    %v1929 = vrcp.pop %v1928
    %v1930 = vmul.f32 %v1925, %v1929
    %1931 = vst [vmem:[#allocation4] sm:$0x3] %v1930
    // Predicated region
    $region62: #{lenet5_forward.1} parent=1 // pred_check
      _
    $region63: #{lenet5_forward.1} parent=1 // pred_check_branch
      %1933 = sbr.rel (0) target = $region65
    $region64: #{lenet5_forward.1} parent=1 // pred_region
      %1935 = vsyncadd [#allocation3], 0
      %s1937 = sshll.u32 [#allocation2], 4
      %s1938 = int_to_ptr.vmem [resolvable:$true] %s1937
      %s1939 = sshll.u32 %s15, 4
      %s1940 = int_to_ptr.hbm [resolvable:$true] %s1939
      %1942 = dma.vmem_to_hbm [thread:$0]  %s1938, 32, %s1940, [#allocation3]
    $region65: #{lenet5_forward.1} parent=1 // pred_fallthru
      _
    // Predicated region
    $region66: #{lenet5_forward.1} parent=1 // pred_check
      _
    $region67: #{lenet5_forward.1} parent=1 // pred_check_branch
      %1944 = sbr.rel (0) target = $region69
    $region68: #{lenet5_forward.1} parent=1 // pred_region
      %1946 = vsyncadd [#allocation5], 0
      %s1948 = sshll.u32 [#allocation4], 4
      %s1949 = int_to_ptr.vmem [resolvable:$true] %s1948
      %s1950 = sshll.u32 %s16, 4
      %s1951 = int_to_ptr.hbm [resolvable:$true] %s1950
      %1953 = dma.vmem_to_hbm [thread:$0]  %s1949, 32, %s1951, [#allocation5]
    $region69: #{lenet5_forward.1} parent=1 // pred_fallthru
      _
    // Predicated region
    $region70: #{lenet5_forward.1} parent=1 // pred_check
      _
    $region71: #{lenet5_forward.1} parent=1 // pred_check_branch
      %1955 = sbr.rel (0) target = $region73
    $region72: #{lenet5_forward.1} parent=1 // pred_region
      %1957 = dma.done [#allocation3], 32
    $region73: #{lenet5_forward.1} parent=1 // pred_fallthru
      _
    // Predicated region
    $region74: #{lenet5_forward.1} parent=1 // pred_check
      _
    $region75: #{lenet5_forward.1} parent=1 // pred_check_branch
      %1959 = sbr.rel (0) target = $region77
    $region76: #{lenet5_forward.1} parent=1 // pred_region
      %1961 = dma.done [#allocation5], 32
    $region77: #{lenet5_forward.1} parent=1 // pred_fallthru
      _
    %1962 = vsyncpa [#allocation3], 1
    %1963 = vsyncpa [#allocation5], 1

</llo_original>
